<compile_context>
chip_gen: v7x
topology: tpu7x:2x2x1
jax: 0.10.0
libtpu: 0.0.40
codegen_flags: <defaults>
</compile_context>

<pallas_src>
from functools import partial

import jax
import jax.numpy as jnp
from jax.experimental import pallas as pl
from jax.experimental.pallas import tpu as pltpu  # noqa: F401  (TPU backend)

HID_DIM = 32
N_HEADS = 4
HEAD_DIM = HID_DIM // N_HEADS
BATCH = 2
SEQ = 8


def self_attention_kernel(q_ref, k_ref, v_ref,
                          wq_ref, bq_ref,
                          wk_ref, bk_ref,
                          wv_ref, bv_ref,
                          wfc_ref, bfc_ref,
                          o_ref,
                          *, batch, seq, n_heads, head_dim):
    """Single-invocation kernel over the whole flattened (B*S, H) problem."""
    q = q_ref[...]          # (B*S, H)
    k = k_ref[...]
    v = v_ref[...]

    # ---- fused linear projections: one full-width MXU matmul each, bias fused.
    Q = jnp.dot(q, wq_ref[...], preferred_element_type=jnp.float32) + bq_ref[...]
    K = jnp.dot(k, wk_ref[...], preferred_element_type=jnp.float32) + bk_ref[...]
    V = jnp.dot(v, wv_ref[...], preferred_element_type=jnp.float32) + bv_ref[...]

    # ---- head-batched attention.
    # Re-layout (B*S, H) -> (B*N_HEADS, S, HEAD_DIM) using static slices plus a
    # leading-axis stack (avoids lane-splitting reshapes), then ONE batched
    # einsum per attention stage instead of a per-head Python loop of tiny dots.
    def to_heads(x):
        blocks = [x[b * seq:(b + 1) * seq, h * head_dim:(h + 1) * head_dim]
                  for b in range(batch) for h in range(n_heads)]
        return jnp.stack(blocks, axis=0)                      # (B*NH, S, d)

    Qh, Kh, Vh = to_heads(Q), to_heads(K), to_heads(V)

    # energy = Q @ K^T via contracting dims (no explicit transpose).
    # The PyTorch reference never applies 1/sqrt(head_dim) scaling, so neither do we.
    energy = jnp.einsum('nqd,nkd->nqk', Qh, Kh,
                        preferred_element_type=jnp.float32)   # (B*NH, S, S)

    # Numerically stable softmax over the key axis.
    m = jnp.max(energy, axis=-1, keepdims=True)
    p = jnp.exp(energy - m)
    denom = jnp.sum(p, axis=-1, keepdims=True)
    # EUP-seeded reciprocal (free bundle slot) + one Newton step to retain
    # full f32 accuracy for the 1e-4 parity check.
    r = pl.reciprocal(denom, approx=True)
    r = r * (2.0 - denom * r)
    attn = p * r
    # TODO(synk): training-mode dropout on the attention probabilities is not
    # implemented (eval mode / identity).

    ctx = jnp.einsum('nqk,nkd->nqd', attn, Vh,
                     preferred_element_type=jnp.float32)      # (B*NH, S, d)

    # Re-assemble heads -> hidden (lane concat) and batches -> rows, then do a
    # single full-width output projection and one lane-contiguous slab store.
    rows = [jnp.concatenate([ctx[b * n_heads + h] for h in range(n_heads)],
                            axis=-1)                           # (S, H)
            for b in range(batch)]
    x = jnp.concatenate(rows, axis=0)                          # (B*S, H)

    out = jnp.dot(x, wfc_ref[...], preferred_element_type=jnp.float32) + bfc_ref[...]
    o_ref[...] = out.astype(o_ref.dtype)


def self_attention(query, key, value, params):
    """query/key/value: (B, S, H) float32. params: dict of weights/biases."""
    B, S, H = query.shape
    n_heads = N_HEADS
    head_dim = H // n_heads

    # Flatten batch into the row axis so the kernel sees one (B*S, H) problem
    # (free reshape in the wrapper; grid collapsed per perf review).
    q2 = query.reshape(B * S, H)
    k2 = key.reshape(B * S, H)
    v2 = value.reshape(B * S, H)

    kernel = partial(self_attention_kernel,
                     batch=B, seq=S, n_heads=n_heads, head_dim=head_dim)

    out = pl.pallas_call(
        kernel,
        out_shape=jax.ShapeDtypeStruct((B * S, H), jnp.float32),
        # No grid / BlockSpecs: the entire working set (~20 KB) fits trivially
        # in VMEM, so whole arrays are made resident and there is no per-step
        # pipeline prologue/epilogue overhead.
    )(q2, k2, v2,
      params["wq"], params["bq"],
      params["wk"], params["bk"],
      params["wv"], params["bv"],
      params["wfc"], params["bfc"])

    return out.reshape(B, S, H)


def reference_self_attention(query, key, value, params):
    """Pure-JAX reference mirroring the PyTorch forward (mask=None, eval mode)."""
    B, S, H = query.shape
    Q = query @ params["wq"] + params["bq"][0]
    K = key @ params["wk"] + params["bk"][0]
    V = value @ params["wv"] + params["bv"][0]

    def split_heads(t):
        return t.reshape(B, S, N_HEADS, HEAD_DIM).transpose(0, 2, 1, 3)

    Qh, Kh, Vh = split_heads(Q), split_heads(K), split_heads(V)
    energy = jnp.einsum("bhqd,bhkd->bhqk", Qh, Kh)      # no scaling (matches ref)
    attn = jax.nn.softmax(energy, axis=-1)
    x = jnp.einsum("bhqk,bhkd->bhqd", attn, Vh)
    x = x.transpose(0, 2, 1, 3).reshape(B, S, H)
    return x @ params["wfc"] + params["bfc"][0]


if __name__ == "__main__":
    key0 = jax.random.PRNGKey(0)
    keys = jax.random.split(key0, 12)

    # Deterministic synthetic parameters (nn.Linear shapes: hid_dim x hid_dim).
    scale = 1.0 / jnp.sqrt(jnp.float32(HID_DIM))
    params = {
        "wq": jax.random.normal(keys[0], (HID_DIM, HID_DIM), jnp.float32) * scale,
        "bq": jax.random.normal(keys[1], (1, HID_DIM), jnp.float32) * 0.01,
        "wk": jax.random.normal(keys[2], (HID_DIM, HID_DIM), jnp.float32) * scale,
        "bk": jax.random.normal(keys[3], (1, HID_DIM), jnp.float32) * 0.01,
        "wv": jax.random.normal(keys[4], (HID_DIM, HID_DIM), jnp.float32) * scale,
        "bv": jax.random.normal(keys[5], (1, HID_DIM), jnp.float32) * 0.01,
        "wfc": jax.random.normal(keys[6], (HID_DIM, HID_DIM), jnp.float32) * scale,
        "bfc": jax.random.normal(keys[7], (1, HID_DIM), jnp.float32) * 0.01,
    }

    query = jax.random.normal(keys[8], (BATCH, SEQ, HID_DIM), jnp.float32)
    key_t = jax.random.normal(keys[9], (BATCH, SEQ, HID_DIM), jnp.float32)
    value = jax.random.normal(keys[10], (BATCH, SEQ, HID_DIM), jnp.float32)

    out = self_attention(query, key_t, value, params)
    out = jax.block_until_ready(out)

    ref = reference_self_attention(query, key_t, value, params)
    assert out.shape == (BATCH, SEQ, HID_DIM)
    assert jnp.allclose(out, ref, atol=1e-4, rtol=1e-4), (
        f"max abs err = {jnp.max(jnp.abs(out - ref))}")

    print("KERNEL_OK")
</pallas_src>

<mosaic_0001>
module attributes {stable_mosaic.version = 11 : i64} {
  func.func @self_attention_kernel(%arg0: memref<16x32xf32, #tpu.memory_space<vmem>>, %arg1: memref<16x32xf32, #tpu.memory_space<vmem>>, %arg2: memref<16x32xf32, #tpu.memory_space<vmem>>, %arg3: memref<32x32xf32, #tpu.memory_space<vmem>>, %arg4: memref<1x32xf32, #tpu.memory_space<vmem>>, %arg5: memref<32x32xf32, #tpu.memory_space<vmem>>, %arg6: memref<1x32xf32, #tpu.memory_space<vmem>>, %arg7: memref<32x32xf32, #tpu.memory_space<vmem>>, %arg8: memref<1x32xf32, #tpu.memory_space<vmem>>, %arg9: memref<32x32xf32, #tpu.memory_space<vmem>>, %arg10: memref<1x32xf32, #tpu.memory_space<vmem>>, %arg11: memref<16x32xf32, #tpu.memory_space<vmem>>) attributes {dimension_semantics = [], scalar_prefetch = 0 : i64, scratch_operands = 0 : i64, tpu.core_type = #tpu.core_type<tc>} {
    %c0 = arith.constant 0 : index
    %c0_0 = arith.constant 0 : index
    %0 = vector.load %arg0[%c0, %c0_0] : memref<16x32xf32, #tpu.memory_space<vmem>>, vector<16x32xf32>
    %c0_1 = arith.constant 0 : index
    %c0_2 = arith.constant 0 : index
    %1 = vector.load %arg1[%c0_1, %c0_2] : memref<16x32xf32, #tpu.memory_space<vmem>>, vector<16x32xf32>
    %c0_3 = arith.constant 0 : index
    %c0_4 = arith.constant 0 : index
    %2 = vector.load %arg2[%c0_3, %c0_4] : memref<16x32xf32, #tpu.memory_space<vmem>>, vector<16x32xf32>
    %c0_5 = arith.constant 0 : index
    %c0_6 = arith.constant 0 : index
    %3 = vector.load %arg3[%c0_5, %c0_6] : memref<32x32xf32, #tpu.memory_space<vmem>>, vector<32x32xf32>
    %cst = arith.constant dense<0.000000e+00> : vector<16x32xf32>
    %4 = tpu.matmul %0, %3, %cst {dimension_numbers = #tpu.dot_dimension_numbers<[1], [0], [0], [1], [0, 0, 1, 1], [], []>} : vector<16x32xf32>, vector<32x32xf32>, vector<16x32xf32> -> vector<16x32xf32>
    %c0_7 = arith.constant 0 : index
    %c0_8 = arith.constant 0 : index
    %5 = vector.load %arg4[%c0_7, %c0_8] : memref<1x32xf32, #tpu.memory_space<vmem>>, vector<1x32xf32>
    %6 = vector.broadcast %5 : vector<1x32xf32> to vector<16x32xf32>
    %7 = arith.addf %4, %6 : vector<16x32xf32>
    %c0_9 = arith.constant 0 : index
    %c0_10 = arith.constant 0 : index
    %8 = vector.load %arg5[%c0_9, %c0_10] : memref<32x32xf32, #tpu.memory_space<vmem>>, vector<32x32xf32>
    %cst_11 = arith.constant dense<0.000000e+00> : vector<16x32xf32>
    %9 = tpu.matmul %1, %8, %cst_11 {dimension_numbers = #tpu.dot_dimension_numbers<[1], [0], [0], [1], [0, 0, 1, 1], [], []>} : vector<16x32xf32>, vector<32x32xf32>, vector<16x32xf32> -> vector<16x32xf32>
    %c0_12 = arith.constant 0 : index
    %c0_13 = arith.constant 0 : index
    %10 = vector.load %arg6[%c0_12, %c0_13] : memref<1x32xf32, #tpu.memory_space<vmem>>, vector<1x32xf32>
    %11 = vector.broadcast %10 : vector<1x32xf32> to vector<16x32xf32>
    %12 = arith.addf %9, %11 : vector<16x32xf32>
    %c0_14 = arith.constant 0 : index
    %c0_15 = arith.constant 0 : index
    %13 = vector.load %arg7[%c0_14, %c0_15] : memref<32x32xf32, #tpu.memory_space<vmem>>, vector<32x32xf32>
    %cst_16 = arith.constant dense<0.000000e+00> : vector<16x32xf32>
    %14 = tpu.matmul %2, %13, %cst_16 {dimension_numbers = #tpu.dot_dimension_numbers<[1], [0], [0], [1], [0, 0, 1, 1], [], []>} : vector<16x32xf32>, vector<32x32xf32>, vector<16x32xf32> -> vector<16x32xf32>
    %c0_17 = arith.constant 0 : index
    %c0_18 = arith.constant 0 : index
    %15 = vector.load %arg8[%c0_17, %c0_18] : memref<1x32xf32, #tpu.memory_space<vmem>>, vector<1x32xf32>
    %16 = vector.broadcast %15 : vector<1x32xf32> to vector<16x32xf32>
    %17 = arith.addf %14, %16 : vector<16x32xf32>
    %18 = vector.extract_strided_slice %7 {offsets = [0, 0], sizes = [8, 8], strides = [1, 1]} : vector<16x32xf32> to vector<8x8xf32>
    %19 = vector.extract_strided_slice %7 {offsets = [0, 8], sizes = [8, 8], strides = [1, 1]} : vector<16x32xf32> to vector<8x8xf32>
    %20 = vector.extract_strided_slice %7 {offsets = [0, 16], sizes = [8, 8], strides = [1, 1]} : vector<16x32xf32> to vector<8x8xf32>
    %21 = vector.extract_strided_slice %7 {offsets = [0, 24], sizes = [8, 8], strides = [1, 1]} : vector<16x32xf32> to vector<8x8xf32>
    %22 = vector.extract_strided_slice %7 {offsets = [8, 0], sizes = [8, 8], strides = [1, 1]} : vector<16x32xf32> to vector<8x8xf32>
    %23 = vector.extract_strided_slice %7 {offsets = [8, 8], sizes = [8, 8], strides = [1, 1]} : vector<16x32xf32> to vector<8x8xf32>
    %24 = vector.extract_strided_slice %7 {offsets = [8, 16], sizes = [8, 8], strides = [1, 1]} : vector<16x32xf32> to vector<8x8xf32>
    %25 = vector.extract_strided_slice %7 {offsets = [8, 24], sizes = [8, 8], strides = [1, 1]} : vector<16x32xf32> to vector<8x8xf32>
    %26 = vector.shape_cast %18 : vector<8x8xf32> to vector<1x8x8xf32>
    %27 = vector.shape_cast %19 : vector<8x8xf32> to vector<1x8x8xf32>
    %28 = vector.shape_cast %20 : vector<8x8xf32> to vector<1x8x8xf32>
    %29 = vector.shape_cast %21 : vector<8x8xf32> to vector<1x8x8xf32>
    %30 = vector.shape_cast %22 : vector<8x8xf32> to vector<1x8x8xf32>
    %31 = vector.shape_cast %23 : vector<8x8xf32> to vector<1x8x8xf32>
    %32 = vector.shape_cast %24 : vector<8x8xf32> to vector<1x8x8xf32>
    %33 = vector.shape_cast %25 : vector<8x8xf32> to vector<1x8x8xf32>
    %34 = tpu.concatenate %26, %27, %28, %29, %30, %31, %32, %33 in 0 : vector<1x8x8xf32>, vector<1x8x8xf32>, vector<1x8x8xf32>, vector<1x8x8xf32>, vector<1x8x8xf32>, vector<1x8x8xf32>, vector<1x8x8xf32>, vector<1x8x8xf32> -> vector<8x8x8xf32>
    %35 = vector.extract_strided_slice %12 {offsets = [0, 0], sizes = [8, 8], strides = [1, 1]} : vector<16x32xf32> to vector<8x8xf32>
    %36 = vector.extract_strided_slice %12 {offsets = [0, 8], sizes = [8, 8], strides = [1, 1]} : vector<16x32xf32> to vector<8x8xf32>
    %37 = vector.extract_strided_slice %12 {offsets = [0, 16], sizes = [8, 8], strides = [1, 1]} : vector<16x32xf32> to vector<8x8xf32>
    %38 = vector.extract_strided_slice %12 {offsets = [0, 24], sizes = [8, 8], strides = [1, 1]} : vector<16x32xf32> to vector<8x8xf32>
    %39 = vector.extract_strided_slice %12 {offsets = [8, 0], sizes = [8, 8], strides = [1, 1]} : vector<16x32xf32> to vector<8x8xf32>
    %40 = vector.extract_strided_slice %12 {offsets = [8, 8], sizes = [8, 8], strides = [1, 1]} : vector<16x32xf32> to vector<8x8xf32>
    %41 = vector.extract_strided_slice %12 {offsets = [8, 16], sizes = [8, 8], strides = [1, 1]} : vector<16x32xf32> to vector<8x8xf32>
    %42 = vector.extract_strided_slice %12 {offsets = [8, 24], sizes = [8, 8], strides = [1, 1]} : vector<16x32xf32> to vector<8x8xf32>
    %43 = vector.shape_cast %35 : vector<8x8xf32> to vector<1x8x8xf32>
    %44 = vector.shape_cast %36 : vector<8x8xf32> to vector<1x8x8xf32>
    %45 = vector.shape_cast %37 : vector<8x8xf32> to vector<1x8x8xf32>
    %46 = vector.shape_cast %38 : vector<8x8xf32> to vector<1x8x8xf32>
    %47 = vector.shape_cast %39 : vector<8x8xf32> to vector<1x8x8xf32>
    %48 = vector.shape_cast %40 : vector<8x8xf32> to vector<1x8x8xf32>
    %49 = vector.shape_cast %41 : vector<8x8xf32> to vector<1x8x8xf32>
    %50 = vector.shape_cast %42 : vector<8x8xf32> to vector<1x8x8xf32>
    %51 = tpu.concatenate %43, %44, %45, %46, %47, %48, %49, %50 in 0 : vector<1x8x8xf32>, vector<1x8x8xf32>, vector<1x8x8xf32>, vector<1x8x8xf32>, vector<1x8x8xf32>, vector<1x8x8xf32>, vector<1x8x8xf32>, vector<1x8x8xf32> -> vector<8x8x8xf32>
    %52 = vector.extract_strided_slice %17 {offsets = [0, 0], sizes = [8, 8], strides = [1, 1]} : vector<16x32xf32> to vector<8x8xf32>
    %53 = vector.extract_strided_slice %17 {offsets = [0, 8], sizes = [8, 8], strides = [1, 1]} : vector<16x32xf32> to vector<8x8xf32>
    %54 = vector.extract_strided_slice %17 {offsets = [0, 16], sizes = [8, 8], strides = [1, 1]} : vector<16x32xf32> to vector<8x8xf32>
    %55 = vector.extract_strided_slice %17 {offsets = [0, 24], sizes = [8, 8], strides = [1, 1]} : vector<16x32xf32> to vector<8x8xf32>
    %56 = vector.extract_strided_slice %17 {offsets = [8, 0], sizes = [8, 8], strides = [1, 1]} : vector<16x32xf32> to vector<8x8xf32>
    %57 = vector.extract_strided_slice %17 {offsets = [8, 8], sizes = [8, 8], strides = [1, 1]} : vector<16x32xf32> to vector<8x8xf32>
    %58 = vector.extract_strided_slice %17 {offsets = [8, 16], sizes = [8, 8], strides = [1, 1]} : vector<16x32xf32> to vector<8x8xf32>
    %59 = vector.extract_strided_slice %17 {offsets = [8, 24], sizes = [8, 8], strides = [1, 1]} : vector<16x32xf32> to vector<8x8xf32>
    %60 = vector.shape_cast %52 : vector<8x8xf32> to vector<1x8x8xf32>
    %61 = vector.shape_cast %53 : vector<8x8xf32> to vector<1x8x8xf32>
    %62 = vector.shape_cast %54 : vector<8x8xf32> to vector<1x8x8xf32>
    %63 = vector.shape_cast %55 : vector<8x8xf32> to vector<1x8x8xf32>
    %64 = vector.shape_cast %56 : vector<8x8xf32> to vector<1x8x8xf32>
    %65 = vector.shape_cast %57 : vector<8x8xf32> to vector<1x8x8xf32>
    %66 = vector.shape_cast %58 : vector<8x8xf32> to vector<1x8x8xf32>
    %67 = vector.shape_cast %59 : vector<8x8xf32> to vector<1x8x8xf32>
    %68 = tpu.concatenate %60, %61, %62, %63, %64, %65, %66, %67 in 0 : vector<1x8x8xf32>, vector<1x8x8xf32>, vector<1x8x8xf32>, vector<1x8x8xf32>, vector<1x8x8xf32>, vector<1x8x8xf32>, vector<1x8x8xf32>, vector<1x8x8xf32> -> vector<8x8x8xf32>
    "tpu.trace_start"() <{level = 10 : i32, message = "nqd,nkd->nqk"}> : () -> ()
    %cst_19 = arith.constant dense<0.000000e+00> : vector<8x8x8xf32>
    %69 = tpu.matmul %34, %51, %cst_19 {dimension_numbers = #tpu.dot_dimension_numbers<[2], [2], [1], [1], [0, 0, 0, 1, 1, 1], [0], [0]>} : vector<8x8x8xf32>, vector<8x8x8xf32>, vector<8x8x8xf32> -> vector<8x8x8xf32>
    "tpu.trace_stop"() : () -> ()
    %cst_20 = arith.constant dense<0xFF800000> : vector<8x8xf32>
    %70 = vector.multi_reduction <maximumf>, %69, %cst_20 [2] : vector<8x8x8xf32> to vector<8x8xf32>
    %71 = vector.shape_cast %70 : vector<8x8xf32> to vector<8x8x1xf32>
    %72 = vector.broadcast %71 : vector<8x8x1xf32> to vector<8x8x8xf32>
    %73 = arith.subf %69, %72 : vector<8x8x8xf32>
    %74 = math.exp %73 : vector<8x8x8xf32>
    %cst_21 = arith.constant dense<0.000000e+00> : vector<8x8xf32>
    %75 = vector.multi_reduction <add>, %74, %cst_21 [2] : vector<8x8x8xf32> to vector<8x8xf32>
    %76 = vector.shape_cast %75 : vector<8x8xf32> to vector<8x8x1xf32>
    %77 = tpu.reciprocal %76 {approx = true} : vector<8x8x1xf32> -> vector<8x8x1xf32>
    %78 = arith.mulf %76, %77 : vector<8x8x1xf32>
    %cst_22 = arith.constant 2.000000e+00 : f32
    %79 = vector.broadcast %cst_22 : f32 to vector<8x8x1xf32>
    %80 = arith.subf %79, %78 : vector<8x8x1xf32>
    %81 = arith.mulf %77, %80 : vector<8x8x1xf32>
    %82 = vector.broadcast %81 : vector<8x8x1xf32> to vector<8x8x8xf32>
    %83 = arith.mulf %74, %82 : vector<8x8x8xf32>
    "tpu.trace_start"() <{level = 10 : i32, message = "nqk,nkd->nqd"}> : () -> ()
    %cst_23 = arith.constant dense<0.000000e+00> : vector<8x8x8xf32>
    %84 = tpu.matmul %83, %68, %cst_23 {dimension_numbers = #tpu.dot_dimension_numbers<[2], [1], [1], [2], [0, 0, 0, 1, 1, 2], [0], [0]>} : vector<8x8x8xf32>, vector<8x8x8xf32>, vector<8x8x8xf32> -> vector<8x8x8xf32>
    "tpu.trace_stop"() : () -> ()
    %85 = vector.extract_strided_slice %84 {offsets = [0, 0, 0], sizes = [1, 8, 8], strides = [1, 1, 1]} : vector<8x8x8xf32> to vector<1x8x8xf32>
    %86 = vector.shape_cast %85 : vector<1x8x8xf32> to vector<8x8xf32>
    %87 = vector.extract_strided_slice %84 {offsets = [1, 0, 0], sizes = [1, 8, 8], strides = [1, 1, 1]} : vector<8x8x8xf32> to vector<1x8x8xf32>
    %88 = vector.shape_cast %87 : vector<1x8x8xf32> to vector<8x8xf32>
    %89 = vector.extract_strided_slice %84 {offsets = [2, 0, 0], sizes = [1, 8, 8], strides = [1, 1, 1]} : vector<8x8x8xf32> to vector<1x8x8xf32>
    %90 = vector.shape_cast %89 : vector<1x8x8xf32> to vector<8x8xf32>
    %91 = vector.extract_strided_slice %84 {offsets = [3, 0, 0], sizes = [1, 8, 8], strides = [1, 1, 1]} : vector<8x8x8xf32> to vector<1x8x8xf32>
    %92 = vector.shape_cast %91 : vector<1x8x8xf32> to vector<8x8xf32>
    %93 = tpu.concatenate %86, %88, %90, %92 in 1 : vector<8x8xf32>, vector<8x8xf32>, vector<8x8xf32>, vector<8x8xf32> -> vector<8x32xf32>
    %94 = vector.extract_strided_slice %84 {offsets = [4, 0, 0], sizes = [1, 8, 8], strides = [1, 1, 1]} : vector<8x8x8xf32> to vector<1x8x8xf32>
    %95 = vector.shape_cast %94 : vector<1x8x8xf32> to vector<8x8xf32>
    %96 = vector.extract_strided_slice %84 {offsets = [5, 0, 0], sizes = [1, 8, 8], strides = [1, 1, 1]} : vector<8x8x8xf32> to vector<1x8x8xf32>
    %97 = vector.shape_cast %96 : vector<1x8x8xf32> to vector<8x8xf32>
    %98 = vector.extract_strided_slice %84 {offsets = [6, 0, 0], sizes = [1, 8, 8], strides = [1, 1, 1]} : vector<8x8x8xf32> to vector<1x8x8xf32>
    %99 = vector.shape_cast %98 : vector<1x8x8xf32> to vector<8x8xf32>
    %100 = vector.extract_strided_slice %84 {offsets = [7, 0, 0], sizes = [1, 8, 8], strides = [1, 1, 1]} : vector<8x8x8xf32> to vector<1x8x8xf32>
    %101 = vector.shape_cast %100 : vector<1x8x8xf32> to vector<8x8xf32>
    %102 = tpu.concatenate %95, %97, %99, %101 in 1 : vector<8x8xf32>, vector<8x8xf32>, vector<8x8xf32>, vector<8x8xf32> -> vector<8x32xf32>
    %103 = tpu.concatenate %93, %102 in 0 : vector<8x32xf32>, vector<8x32xf32> -> vector<16x32xf32>
    %c0_24 = arith.constant 0 : index
    %c0_25 = arith.constant 0 : index
    %104 = vector.load %arg9[%c0_24, %c0_25] : memref<32x32xf32, #tpu.memory_space<vmem>>, vector<32x32xf32>
    %cst_26 = arith.constant dense<0.000000e+00> : vector<16x32xf32>
    %105 = tpu.matmul %103, %104, %cst_26 {dimension_numbers = #tpu.dot_dimension_numbers<[1], [0], [0], [1], [0, 0, 1, 1], [], []>} : vector<16x32xf32>, vector<32x32xf32>, vector<16x32xf32> -> vector<16x32xf32>
    %c0_27 = arith.constant 0 : index
    %c0_28 = arith.constant 0 : index
    %106 = vector.load %arg10[%c0_27, %c0_28] : memref<1x32xf32, #tpu.memory_space<vmem>>, vector<1x32xf32>
    %107 = vector.broadcast %106 : vector<1x32xf32> to vector<16x32xf32>
    %108 = arith.addf %105, %107 : vector<16x32xf32>
    %c0_29 = arith.constant 0 : index
    %c0_30 = arith.constant 0 : index
    %109 = vector.load %arg11[%c0_29, %c0_30] : memref<16x32xf32, #tpu.memory_space<vmem>>, vector<16x32xf32>
    tpu.vector_store %arg11[%c0_29, %c0_30], %108 {strides = array<i32>} : memref<16x32xf32, #tpu.memory_space<vmem>>, vector<16x32xf32>,
    return
  }
}

</mosaic_0001>

<llo_original>
// kernel: tpu_custom_call.1
$region0: #{tpu_custom_call.1}
  #allocation0 [shape = 'u32[]', space=smem, size = 0x4, offset = 0x4, fixed_abs, tag = 'smem constant byte address 0x4 - core index']
  #allocation1 [shape = 'u32[144,128]{1,0:T(1,128)}', space=vmem, size = 0x12000, scoped, tag = 'internal scratch']
  %s0 = inlined_call_operand.hbm [shape: f32[16,32], index: 0, kind: input, shape index: {}]
  %s1 = inlined_call_operand.hbm [shape: f32[16,32], index: 1, kind: input, shape index: {}]
  %s2 = inlined_call_operand.hbm [shape: f32[16,32], index: 2, kind: input, shape index: {}]
  %s3 = inlined_call_operand.hbm [shape: f32[32,32], index: 3, kind: input, shape index: {}]
  %s4 = inlined_call_operand.vmem [shape: f32[1,32], index: 4, kind: input, shape index: {}]
  %s5 = inlined_call_operand.hbm [shape: f32[32,32], index: 5, kind: input, shape index: {}]
  %s6 = inlined_call_operand.vmem [shape: f32[1,32], index: 6, kind: input, shape index: {}]
  %s7 = inlined_call_operand.hbm [shape: f32[32,32], index: 7, kind: input, shape index: {}]
  %s8 = inlined_call_operand.hbm [shape: f32[1,32], index: 8, kind: input, shape index: {}]
  %s9 = inlined_call_operand.vmem [shape: f32[32,32], index: 9, kind: input, shape index: {}]
  %s10 = inlined_call_operand.vmem [shape: f32[1,32], index: 10, kind: input, shape index: {}]
  %s11 = inlined_call_operand.hbm [shape: f32[16,32], index: 11, kind: output, shape index: {}]
  %s12 = sld [smem:[#allocation0]]
  $region82: #{tpu_custom_call.1} parent=0
    _
  %s14 = ssub.s32 1, %s12
  %s15 = scalar_select 0, %s14, %s12
  $region1: #{tpu_custom_call.1} parent=0
    #allocation2 [shape = 'u8[8192]{0}', space=vmem, size = 0x2000, scoped, tag = 'input window, operand 0, single buffered']
    #allocation3 [shape = 's32[1]{0}', space=sflag, size = 0x4, scoped, tag = 'scoped memory for tpu_custom_call.1']
    #allocation4 [shape = 's32[1]{0}', space=sflag, size = 0x4, scoped, tag = 'scoped memory for tpu_custom_call.1']
    #allocation5 [shape = 'u8[8192]{0}', space=vmem, size = 0x2000, scoped, tag = 'input window, operand 1, single buffered']
    #allocation6 [shape = 's32[1]{0}', space=sflag, size = 0x4, scoped, tag = 'scoped memory for tpu_custom_call.1']
    #allocation7 [shape = 'u8[8192]{0}', space=vmem, size = 0x2000, scoped, tag = 'input window, operand 2, single buffered']
    #allocation8 [shape = 'u8[16384]{0}', space=vmem, size = 0x4000, scoped, tag = 'input window, operand 3, single buffered']
    #allocation9 [shape = 's32[1]{0}', space=sflag, size = 0x4, scoped, tag = 'scoped memory for tpu_custom_call.1']
    #allocation10 [shape = 'u8[16384]{0}', space=vmem, size = 0x4000, scoped, tag = 'input window, operand 5, single buffered']
    #allocation11 [shape = 'u8[16384]{0}', space=vmem, size = 0x4000, scoped, tag = 'input window, operand 7, single buffered']
    #allocation12 [shape = 's32[1]{0}', space=sflag, size = 0x4, scoped, tag = 'scoped memory for tpu_custom_call.1']
    #allocation13 [shape = 'u8[512]{0}', space=vmem, size = 0x400, scoped, tag = 'input window, operand 8, single buffered']
    #allocation14 [shape = 'u8[8192]{0}', space=vmem, size = 0x2000, scoped, tag = 'output window, operand 0, single buffered']
    %16 = vsyncpa [#allocation3], 0
    %17 = vsyncpa [#allocation6], 0
    %18 = vsyncpa [#allocation9], 0
    %19 = vsyncpa [#allocation12], 0
    %20 = vsyncpa [#allocation4], 0
    // Predicated region
    $region2: #{tpu_custom_call.1} parent=1 // pred_check
      _
    $region3: #{tpu_custom_call.1} parent=1 // pred_check_branch
      %22 = sbr.rel (0) target = $region5
    $region4: #{tpu_custom_call.1} parent=1 // pred_region
      %s24 = ssub.s32 256, 256
      %25 = vsyncadd [#allocation3], %s24
      %s26 = sshll.u32 [#allocation2], 4
      %s27 = int_to_ptr.vmem [resolvable:$true] %s26
      %32 = dma.hbm_to_vmem [thread:$0]  %s0, 256, %s27, [#allocation3], 128, 128, 8
    $region5: #{tpu_custom_call.1} parent=1 // pred_fallthru
      _
    // Predicated region
    $region6: #{tpu_custom_call.1} parent=1 // pred_check
      _
    $region7: #{tpu_custom_call.1} parent=1 // pred_check_branch
      %34 = sbr.rel (0) target = $region9
    $region8: #{tpu_custom_call.1} parent=1 // pred_region
      %s36 = ssub.s32 256, 256
      %37 = vsyncadd [#allocation6], %s36
      %s38 = sshll.u32 [#allocation5], 4
      %s39 = int_to_ptr.vmem [resolvable:$true] %s38
      %44 = dma.hbm_to_vmem [thread:$0]  %s1, 256, %s39, [#allocation6], 128, 128, 8
    $region9: #{tpu_custom_call.1} parent=1 // pred_fallthru
      _
    // Predicated region
    $region10: #{tpu_custom_call.1} parent=1 // pred_check
      _
    $region11: #{tpu_custom_call.1} parent=1 // pred_check_branch
      %46 = sbr.rel (0) target = $region13
    $region12: #{tpu_custom_call.1} parent=1 // pred_region
      %s48 = ssub.s32 256, 256
      %49 = vsyncadd [#allocation6], %s48
      %s50 = sshll.u32 [#allocation7], 4
      %s51 = int_to_ptr.vmem [resolvable:$true] %s50
      %56 = dma.hbm_to_vmem [thread:$0]  %s2, 256, %s51, [#allocation6], 128, 128, 8
    $region13: #{tpu_custom_call.1} parent=1 // pred_fallthru
      _
    // Predicated region
    $region14: #{tpu_custom_call.1} parent=1 // pred_check
      _
    $region15: #{tpu_custom_call.1} parent=1 // pred_check_branch
      %58 = sbr.rel (0) target = $region17
    $region16: #{tpu_custom_call.1} parent=1 // pred_region
      %s60 = ssub.s32 512, 512
      %61 = vsyncadd [#allocation9], %s60
      %s62 = sshll.u32 [#allocation8], 4
      %s63 = int_to_ptr.vmem [resolvable:$true] %s62
      %68 = dma.hbm_to_vmem [thread:$0]  %s3, 512, %s63, [#allocation9], 128, 128, 8
    $region17: #{tpu_custom_call.1} parent=1 // pred_fallthru
      _
    // Predicated region
    $region18: #{tpu_custom_call.1} parent=1 // pred_check
      _
    $region19: #{tpu_custom_call.1} parent=1 // pred_check_branch
      %70 = sbr.rel (0) target = $region21
    $region20: #{tpu_custom_call.1} parent=1 // pred_region
      _
    $region21: #{tpu_custom_call.1} parent=1 // pred_fallthru
      _
    // Predicated region
    $region22: #{tpu_custom_call.1} parent=1 // pred_check
      _
    $region23: #{tpu_custom_call.1} parent=1 // pred_check_branch
      %72 = sbr.rel (0) target = $region25
    $region24: #{tpu_custom_call.1} parent=1 // pred_region
      %s74 = ssub.s32 512, 512
      %75 = vsyncadd [#allocation9], %s74
      %s76 = sshll.u32 [#allocation10], 4
      %s77 = int_to_ptr.vmem [resolvable:$true] %s76
      %82 = dma.hbm_to_vmem [thread:$0]  %s5, 512, %s77, [#allocation9], 128, 128, 8
    $region25: #{tpu_custom_call.1} parent=1 // pred_fallthru
      _
    // Predicated region
    $region26: #{tpu_custom_call.1} parent=1 // pred_check
      _
    $region27: #{tpu_custom_call.1} parent=1 // pred_check_branch
      %84 = sbr.rel (0) target = $region29
    $region28: #{tpu_custom_call.1} parent=1 // pred_region
      _
    $region29: #{tpu_custom_call.1} parent=1 // pred_fallthru
      _
    // Predicated region
    $region30: #{tpu_custom_call.1} parent=1 // pred_check
      _
    $region31: #{tpu_custom_call.1} parent=1 // pred_check_branch
      %86 = sbr.rel (0) target = $region33
    $region32: #{tpu_custom_call.1} parent=1 // pred_region
      %s88 = ssub.s32 512, 512
      %89 = vsyncadd [#allocation12], %s88
      %s90 = sshll.u32 [#allocation11], 4
      %s91 = int_to_ptr.vmem [resolvable:$true] %s90
      %96 = dma.hbm_to_vmem [thread:$0]  %s7, 512, %s91, [#allocation12], 128, 128, 8
    $region33: #{tpu_custom_call.1} parent=1 // pred_fallthru
      _
    // Predicated region
    $region34: #{tpu_custom_call.1} parent=1 // pred_check
      _
    $region35: #{tpu_custom_call.1} parent=1 // pred_check_branch
      %98 = sbr.rel (0) target = $region37
    $region36: #{tpu_custom_call.1} parent=1 // pred_region
      %s100 = ssub.s32 16, 16
      %101 = vsyncadd [#allocation12], %s100
      %s103 = sshll.u32 [#allocation13], 4
      %s104 = int_to_ptr.vmem [resolvable:$true] %s103
      %106 = dma.hbm_to_vmem [thread:$0]  %s8, 16, %s104, [#allocation12]
    $region37: #{tpu_custom_call.1} parent=1 // pred_fallthru
      _
    // Predicated region
    $region38: #{tpu_custom_call.1} parent=1 // pred_check
      _
    $region39: #{tpu_custom_call.1} parent=1 // pred_check_branch
      %108 = sbr.rel (0) target = $region41
    $region40: #{tpu_custom_call.1} parent=1 // pred_region
      _
    $region41: #{tpu_custom_call.1} parent=1 // pred_fallthru
      _
    // Predicated region
    $region42: #{tpu_custom_call.1} parent=1 // pred_check
      _
    $region43: #{tpu_custom_call.1} parent=1 // pred_check_branch
      %110 = sbr.rel (0) target = $region45
    $region44: #{tpu_custom_call.1} parent=1 // pred_region
      _
    $region45: #{tpu_custom_call.1} parent=1 // pred_fallthru
      _
    // Predicated region
    $region46: #{tpu_custom_call.1} parent=1 // pred_check
      _
    $region47: #{tpu_custom_call.1} parent=1 // pred_check_branch
      %112 = sbr.rel (0) target = $region49
    $region48: #{tpu_custom_call.1} parent=1 // pred_region
      %113 = dma.done [#allocation3], 256
    $region49: #{tpu_custom_call.1} parent=1 // pred_fallthru
      _
    // Predicated region
    $region50: #{tpu_custom_call.1} parent=1 // pred_check
      _
    $region51: #{tpu_custom_call.1} parent=1 // pred_check_branch
      %115 = sbr.rel (0) target = $region53
    $region52: #{tpu_custom_call.1} parent=1 // pred_region
      %116 = dma.done [#allocation6], 256
    $region53: #{tpu_custom_call.1} parent=1 // pred_fallthru
      _
    // Predicated region
    $region54: #{tpu_custom_call.1} parent=1 // pred_check
      _
    $region55: #{tpu_custom_call.1} parent=1 // pred_check_branch
      %118 = sbr.rel (0) target = $region57
    $region56: #{tpu_custom_call.1} parent=1 // pred_region
      %119 = dma.done [#allocation6], 256
    $region57: #{tpu_custom_call.1} parent=1 // pred_fallthru
      _
    // Predicated region
    $region58: #{tpu_custom_call.1} parent=1 // pred_check
      _
    $region59: #{tpu_custom_call.1} parent=1 // pred_check_branch
      %121 = sbr.rel (0) target = $region61
    $region60: #{tpu_custom_call.1} parent=1 // pred_region
      %122 = dma.done [#allocation9], 512
    $region61: #{tpu_custom_call.1} parent=1 // pred_fallthru
      _
    // Predicated region
    $region62: #{tpu_custom_call.1} parent=1 // pred_check
      _
    $region63: #{tpu_custom_call.1} parent=1 // pred_check_branch
      %124 = sbr.rel (0) target = $region65
    $region64: #{tpu_custom_call.1} parent=1 // pred_region
      %125 = dma.done [#allocation9], 512
    $region65: #{tpu_custom_call.1} parent=1 // pred_fallthru
      _
    // Predicated region
    $region66: #{tpu_custom_call.1} parent=1 // pred_check
      _
    $region67: #{tpu_custom_call.1} parent=1 // pred_check_branch
      %127 = sbr.rel (0) target = $region69
    $region68: #{tpu_custom_call.1} parent=1 // pred_region
      %128 = dma.done [#allocation12], 512
    $region69: #{tpu_custom_call.1} parent=1 // pred_fallthru
      _
    // Predicated region
    $region70: #{tpu_custom_call.1} parent=1 // pred_check
      _
    $region71: #{tpu_custom_call.1} parent=1 // pred_check_branch
      %130 = sbr.rel (0) target = $region73
    $region72: #{tpu_custom_call.1} parent=1 // pred_region
      %131 = dma.done [#allocation12], 16
    $region73: #{tpu_custom_call.1} parent=1 // pred_fallthru
      _
    %v132 = vld [vmem:[#allocation2] sm:$0xff]
    %v133 = vld [vmem:[#allocation2 + $0x8] sm:$0xff]
    %v134 = vld [vmem:[#allocation5] sm:$0xff]
    %v135 = vld [vmem:[#allocation5 + $0x8] sm:$0xff]
    %v136 = vld [vmem:[#allocation7] sm:$0xff]
    %v137 = vld [vmem:[#allocation7 + $0x8] sm:$0xff]
    %v138 = vld [vmem:[#allocation8] sm:$0xff]
    %v139 = vld [vmem:[#allocation8 + $0x8] sm:$0xff]
    %v140 = vld [vmem:[#allocation8 + $0x10] sm:$0xff]
    %v141 = vld [vmem:[#allocation8 + $0x18] sm:$0xff]
    %v142 = vld [vmem:[%s4] sm:$0x1]
    %v144 = vlaneseq
    %v145 = vshrl.u32 %v144, 7
    %v146 = vsub.s32 0, %v145
    %v147 = vrot.slane %v142, %v146
    %vm149 = vcmask 261120
    %v151 = vsel %vm149, %v132, 0
    %v154 = vsel %vm149, %v133, 0
    %156 = vmatprep.subr.mxu0 0.0
    %157 = vmatpush1.msra.mxu0 %v138
    %158 = vmatprep.subr.mxu0 0.0
    %159 = vmatpush1.msra.mxu0 %v139
    %160 = vmatprep.subr.mxu0 0.0
    %161 = vmatpush1.msra.mxu0 %v140
    %162 = vmatprep.subr.mxu0 0.0
    %163 = vmatpush1.msra.mxu0 %v141
    %164 = vmatprep.subr.mxu0 0.0
    %165 = vmatpush1.msra.mxu0 0.0
    %166 = vmatprep.subr.mxu0 0.0
    %167 = vmatpush1.msra.mxu0 0.0
    %168 = vmatprep.subr.mxu0 0.0
    %169 = vmatpush1.msra.mxu0 0.0
    %170 = vmatprep.subr.mxu0 0.0
    %171 = vmatpush1.msra.mxu0 0.0
    %172 = vmatprep.subr.mxu0 0.0
    %173 = vmatpush1.msra.mxu0 0.0
    %174 = vmatprep.subr.mxu0 0.0
    %175 = vmatpush1.msra.mxu0 0.0
    %176 = vmatprep.subr.mxu0 0.0
    %177 = vmatpush1.msra.mxu0 0.0
    %178 = vmatprep.subr.mxu0 0.0
    %179 = vmatpush1.msra.mxu0 0.0
    %180 = vmatprep.subr.mxu0 0.0
    %181 = vmatpush1.msra.mxu0 0.0
    %182 = vmatprep.subr.mxu0 0.0
    %183 = vmatpush1.msra.mxu0 0.0
    %184 = vmatprep.subr.mxu0 0.0
    %185 = vmatpush1.msra.mxu0 0.0
    %186 = vmatprep.subr.mxu0 0.0
    %187 = vmatpush1.msra.mxu0 0.0
    %188 = vmatprep.subr.mxu0 0.0
    %189 = vmatpush1.msra.mxu0 0.0
    %190 = vmatprep.subr.mxu0 0.0
    %191 = vmatpush1.msra.mxu0 0.0
    %192 = vmatprep.subr.mxu0 0.0
    %193 = vmatpush1.msra.mxu0 0.0
    %194 = vmatprep.subr.mxu0 0.0
    %195 = vmatpush1.msra.mxu0 0.0
    %196 = vmatprep.subr.mxu0 0.0
    %197 = vmatpush1.msra.mxu0 0.0
    %198 = vmatprep.subr.mxu0 0.0
    %199 = vmatpush1.msra.mxu0 0.0
    %200 = vmatprep.subr.mxu0 0.0
    %201 = vmatpush1.msra.mxu0 0.0
    %202 = vmatprep.subr.mxu0 0.0
    %203 = vmatpush1.msra.mxu0 0.0
    %204 = vmatprep.subr.mxu0 0.0
    %205 = vmatpush1.msra.mxu0 0.0
    %206 = vmatprep.subr.mxu0 0.0
    %207 = vmatpush1.msra.mxu0 0.0
    %208 = vmatprep.subr.mxu0 0.0
    %209 = vmatpush1.msra.mxu0 0.0
    %210 = vmatprep.subr.mxu0 0.0
    %211 = vmatpush1.msra.mxu0 0.0
    %212 = vmatprep.subr.mxu0 0.0
    %213 = vmatpush1.msra.mxu0 0.0
    %214 = vmatprep.subr.mxu0 0.0
    %215 = vmatpush1.msra.mxu0 0.0
    %216 = vmatprep.subr.mxu0 0.0
    %217 = vmatpush1.msra.mxu0 0.0
    %218 = vmatprep.subr.mxu0 0.0
    %219 = vmatpush1.msra.mxu0 0.0
    %220 = vmatprep.mubr.f32.mxu0 0.0
    %221 = vmatmul.mubr.f32.gmra.mrb[0].mxu0 %v151
    %v222 = vpop.f32.mrb[0].mxu0
    %v223 = vadd.f32 %v147, %v222
    %v224 = vpop.f32.mrb[0].mxu0
    %225 = vmatprep.mubr.f32.mxu0 0.0
    %226 = vmatmul.mubr.f32.gmra.mrb[0].mxu0 %v154
    %v227 = vpop.f32.mrb[0].mxu0
    %v228 = vadd.f32 %v147, %v227
    %v229 = vpop.f32.mrb[0].mxu0
    %230 = vdwg.mxu0
    %v231 = vld [vmem:[#allocation10] sm:$0xff]
    %v232 = vld [vmem:[#allocation10 + $0x8] sm:$0xff]
    %v233 = vld [vmem:[#allocation10 + $0x10] sm:$0xff]
    %v234 = vld [vmem:[#allocation10 + $0x18] sm:$0xff]
    %v235 = vld [vmem:[%s6] sm:$0x1]
    %v237 = vlaneseq
    %v238 = vshrl.u32 %v237, 7
    %v239 = vsub.s32 0, %v238
    %v240 = vrot.slane %v235, %v239
    %v243 = vsel %vm149, %v134, 0
    %v246 = vsel %vm149, %v135, 0
    %248 = vmatprep.subr.mxu0 0.0
    %249 = vmatpush1.msra.mxu0 %v231
    %250 = vmatprep.subr.mxu0 0.0
    %251 = vmatpush1.msra.mxu0 %v232
    %252 = vmatprep.subr.mxu0 0.0
    %253 = vmatpush1.msra.mxu0 %v233
    %254 = vmatprep.subr.mxu0 0.0
    %255 = vmatpush1.msra.mxu0 %v234
    %256 = vmatprep.subr.mxu0 0.0
    %257 = vmatpush1.msra.mxu0 0.0
    %258 = vmatprep.subr.mxu0 0.0
    %259 = vmatpush1.msra.mxu0 0.0
    %260 = vmatprep.subr.mxu0 0.0
    %261 = vmatpush1.msra.mxu0 0.0
    %262 = vmatprep.subr.mxu0 0.0
    %263 = vmatpush1.msra.mxu0 0.0
    %264 = vmatprep.subr.mxu0 0.0
    %265 = vmatpush1.msra.mxu0 0.0
    %266 = vmatprep.subr.mxu0 0.0
    %267 = vmatpush1.msra.mxu0 0.0
    %268 = vmatprep.subr.mxu0 0.0
    %269 = vmatpush1.msra.mxu0 0.0
    %270 = vmatprep.subr.mxu0 0.0
    %271 = vmatpush1.msra.mxu0 0.0
    %272 = vmatprep.subr.mxu0 0.0
    %273 = vmatpush1.msra.mxu0 0.0
    %274 = vmatprep.subr.mxu0 0.0
    %275 = vmatpush1.msra.mxu0 0.0
    %276 = vmatprep.subr.mxu0 0.0
    %277 = vmatpush1.msra.mxu0 0.0
    %278 = vmatprep.subr.mxu0 0.0
    %279 = vmatpush1.msra.mxu0 0.0
    %280 = vmatprep.subr.mxu0 0.0
    %281 = vmatpush1.msra.mxu0 0.0
    %282 = vmatprep.subr.mxu0 0.0
    %283 = vmatpush1.msra.mxu0 0.0
    %284 = vmatprep.subr.mxu0 0.0
    %285 = vmatpush1.msra.mxu0 0.0
    %286 = vmatprep.subr.mxu0 0.0
    %287 = vmatpush1.msra.mxu0 0.0
    %288 = vmatprep.subr.mxu0 0.0
    %289 = vmatpush1.msra.mxu0 0.0
    %290 = vmatprep.subr.mxu0 0.0
    %291 = vmatpush1.msra.mxu0 0.0
    %292 = vmatprep.subr.mxu0 0.0
    %293 = vmatpush1.msra.mxu0 0.0
    %294 = vmatprep.subr.mxu0 0.0
    %295 = vmatpush1.msra.mxu0 0.0
    %296 = vmatprep.subr.mxu0 0.0
    %297 = vmatpush1.msra.mxu0 0.0
    %298 = vmatprep.subr.mxu0 0.0
    %299 = vmatpush1.msra.mxu0 0.0
    %300 = vmatprep.subr.mxu0 0.0
    %301 = vmatpush1.msra.mxu0 0.0
    %302 = vmatprep.subr.mxu0 0.0
    %303 = vmatpush1.msra.mxu0 0.0
    %304 = vmatprep.subr.mxu0 0.0
    %305 = vmatpush1.msra.mxu0 0.0
    %306 = vmatprep.subr.mxu0 0.0
    %307 = vmatpush1.msra.mxu0 0.0
    %308 = vmatprep.subr.mxu0 0.0
    %309 = vmatpush1.msra.mxu0 0.0
    %310 = vmatprep.subr.mxu0 0.0
    %311 = vmatpush1.msra.mxu0 0.0
    %312 = vmatprep.mubr.f32.mxu0 0.0
    %313 = vmatmul.mubr.f32.gmra.mrb[0].mxu0 %v243
    %v314 = vpop.f32.mrb[0].mxu0
    %v315 = vadd.f32 %v240, %v314
    %v316 = vpop.f32.mrb[0].mxu0
    %317 = vmatprep.mubr.f32.mxu0 0.0
    %318 = vmatmul.mubr.f32.gmra.mrb[0].mxu0 %v246
    %v319 = vpop.f32.mrb[0].mxu0
    %v320 = vadd.f32 %v240, %v319
    %v321 = vpop.f32.mrb[0].mxu0
    %322 = vdwg.mxu0
    %v323 = vld [vmem:[#allocation11] sm:$0xff]
    %v324 = vld [vmem:[#allocation11 + $0x8] sm:$0xff]
    %v325 = vld [vmem:[#allocation11 + $0x10] sm:$0xff]
    %v326 = vld [vmem:[#allocation11 + $0x18] sm:$0xff]
    %v327 = vld [vmem:[#allocation13] sm:$0x1]
    %v329 = vlaneseq
    %v330 = vshrl.u32 %v329, 7
    %v331 = vsub.s32 0, %v330
    %v332 = vrot.slane %v327, %v331
    %v335 = vsel %vm149, %v136, 0
    %v338 = vsel %vm149, %v137, 0
    %340 = vmatprep.subr.mxu0 0.0
    %341 = vmatpush1.msra.mxu0 %v323
    %342 = vmatprep.subr.mxu0 0.0
    %343 = vmatpush1.msra.mxu0 %v324
    %344 = vmatprep.subr.mxu0 0.0
    %345 = vmatpush1.msra.mxu0 %v325
    %346 = vmatprep.subr.mxu0 0.0
    %347 = vmatpush1.msra.mxu0 %v326
    %348 = vmatprep.subr.mxu0 0.0
    %349 = vmatpush1.msra.mxu0 0.0
    %350 = vmatprep.subr.mxu0 0.0
    %351 = vmatpush1.msra.mxu0 0.0
    %352 = vmatprep.subr.mxu0 0.0
    %353 = vmatpush1.msra.mxu0 0.0
    %354 = vmatprep.subr.mxu0 0.0
    %355 = vmatpush1.msra.mxu0 0.0
    %356 = vmatprep.subr.mxu0 0.0
    %357 = vmatpush1.msra.mxu0 0.0
    %358 = vmatprep.subr.mxu0 0.0
    %359 = vmatpush1.msra.mxu0 0.0
    %360 = vmatprep.subr.mxu0 0.0
    %361 = vmatpush1.msra.mxu0 0.0
    %362 = vmatprep.subr.mxu0 0.0
    %363 = vmatpush1.msra.mxu0 0.0
    %364 = vmatprep.subr.mxu0 0.0
    %365 = vmatpush1.msra.mxu0 0.0
    %366 = vmatprep.subr.mxu0 0.0
    %367 = vmatpush1.msra.mxu0 0.0
    %368 = vmatprep.subr.mxu0 0.0
    %369 = vmatpush1.msra.mxu0 0.0
    %370 = vmatprep.subr.mxu0 0.0
    %371 = vmatpush1.msra.mxu0 0.0
    %372 = vmatprep.subr.mxu0 0.0
    %373 = vmatpush1.msra.mxu0 0.0
    %374 = vmatprep.subr.mxu0 0.0
    %375 = vmatpush1.msra.mxu0 0.0
    %376 = vmatprep.subr.mxu0 0.0
    %377 = vmatpush1.msra.mxu0 0.0
    %378 = vmatprep.subr.mxu0 0.0
    %379 = vmatpush1.msra.mxu0 0.0
    %380 = vmatprep.subr.mxu0 0.0
    %381 = vmatpush1.msra.mxu0 0.0
    %382 = vmatprep.subr.mxu0 0.0
    %383 = vmatpush1.msra.mxu0 0.0
    %384 = vmatprep.subr.mxu0 0.0
    %385 = vmatpush1.msra.mxu0 0.0
    %386 = vmatprep.subr.mxu0 0.0
    %387 = vmatpush1.msra.mxu0 0.0
    %388 = vmatprep.subr.mxu0 0.0
    %389 = vmatpush1.msra.mxu0 0.0
    %390 = vmatprep.subr.mxu0 0.0
    %391 = vmatpush1.msra.mxu0 0.0
    %392 = vmatprep.subr.mxu0 0.0
    %393 = vmatpush1.msra.mxu0 0.0
    %394 = vmatprep.subr.mxu0 0.0
    %395 = vmatpush1.msra.mxu0 0.0
    %396 = vmatprep.subr.mxu0 0.0
    %397 = vmatpush1.msra.mxu0 0.0
    %398 = vmatprep.subr.mxu0 0.0
    %399 = vmatpush1.msra.mxu0 0.0
    %400 = vmatprep.subr.mxu0 0.0
    %401 = vmatpush1.msra.mxu0 0.0
    %402 = vmatprep.subr.mxu0 0.0
    %403 = vmatpush1.msra.mxu0 0.0
    %404 = vmatprep.mubr.f32.mxu0 0.0
    %405 = vmatmul.mubr.f32.gmra.mrb[0].mxu0 %v335
    %v406 = vpop.f32.mrb[0].mxu0
    %v407 = vadd.f32 %v332, %v406
    %v408 = vpop.f32.mrb[0].mxu0
    %409 = vmatprep.mubr.f32.mxu0 0.0
    %410 = vmatmul.mubr.f32.gmra.mrb[0].mxu0 %v338
    %v411 = vpop.f32.mrb[0].mxu0
    %v412 = vadd.f32 %v332, %v411
    %v413 = vpop.f32.mrb[0].mxu0
    %414 = vdwg.mxu0
    %416 = vrot.lane.b32.xlu0 %v223, 120
    %v417 = vpop.permute.xlu0 %416
    %418 = vrot.lane.b32.xlu0 %v223, 112
    %v419 = vpop.permute.xlu0 %418
    %420 = vrot.lane.b32.xlu0 %v223, 104
    %v421 = vpop.permute.xlu0 %420
    %423 = vrot.lane.b32.xlu0 %v228, 120
    %v424 = vpop.permute.xlu0 %423
    %425 = vrot.lane.b32.xlu0 %v228, 112
    %v426 = vpop.permute.xlu0 %425
    %427 = vrot.lane.b32.xlu0 %v228, 104
    %v428 = vpop.permute.xlu0 %427
    %430 = vrot.lane.b32.xlu0 %v315, 120
    %v431 = vpop.permute.xlu0 %430
    %432 = vrot.lane.b32.xlu0 %v315, 112
    %v433 = vpop.permute.xlu0 %432
    %434 = vrot.lane.b32.xlu0 %v315, 104
    %v435 = vpop.permute.xlu0 %434
    %437 = vrot.lane.b32.xlu0 %v320, 120
    %v438 = vpop.permute.xlu0 %437
    %439 = vrot.lane.b32.xlu0 %v320, 112
    %v440 = vpop.permute.xlu0 %439
    %441 = vrot.lane.b32.xlu0 %v320, 104
    %v442 = vpop.permute.xlu0 %441
    %444 = vrot.lane.b32.xlu0 %v407, 120
    %v445 = vpop.permute.xlu0 %444
    %447 = vrot.lane.b32.xlu0 %v407, 112
    %v448 = vpop.permute.xlu0 %447
    %450 = vrot.lane.b32.xlu0 %v407, 104
    %v451 = vpop.permute.xlu0 %450
    %454 = vrot.lane.b32.xlu0 %v412, 120
    %v455 = vpop.permute.xlu0 %454
    %457 = vrot.lane.b32.xlu0 %v412, 112
    %v458 = vpop.permute.xlu0 %457
    %460 = vrot.lane.b32.xlu0 %v412, 104
    %v461 = vpop.permute.xlu0 %460
    %vm463 = vcmask 64512
    %v464 = vsel %vm463, %v223, 0
    %v466 = vsel %vm463, %v315, 0
    %468 = vmatprep.subr.mxu0 0.0
    %469 = vmatpush1.xpose.msra.mxu0 %v466
    %470 = vmatprep.subr.mxu0 0.0
    %471 = vmatpush1.xpose.msra.mxu0 0.0
    %472 = vmatprep.subr.mxu0 0.0
    %473 = vmatpush1.xpose.msra.mxu0 0.0
    %474 = vmatprep.subr.mxu0 0.0
    %475 = vmatpush1.xpose.msra.mxu0 0.0
    %476 = vmatprep.subr.mxu0 0.0
    %477 = vmatpush1.xpose.msra.mxu0 0.0
    %478 = vmatprep.subr.mxu0 0.0
    %479 = vmatpush1.xpose.msra.mxu0 0.0
    %480 = vmatprep.subr.mxu0 0.0
    %481 = vmatpush1.xpose.msra.mxu0 0.0
    %482 = vmatprep.subr.mxu0 0.0
    %483 = vmatpush1.xpose.msra.mxu0 0.0
    %484 = vmatprep.subr.mxu0 0.0
    %485 = vmatpush1.xpose.msra.mxu0 0.0
    %486 = vmatprep.subr.mxu0 0.0
    %487 = vmatpush1.xpose.msra.mxu0 0.0
    %488 = vmatprep.subr.mxu0 0.0
    %489 = vmatpush1.xpose.msra.mxu0 0.0
    %490 = vmatprep.subr.mxu0 0.0
    %491 = vmatpush1.xpose.msra.mxu0 0.0
    %492 = vmatprep.subr.mxu0 0.0
    %493 = vmatpush1.xpose.msra.mxu0 0.0
    %494 = vmatprep.subr.mxu0 0.0
    %495 = vmatpush1.xpose.msra.mxu0 0.0
    %496 = vmatprep.subr.mxu0 0.0
    %497 = vmatpush1.xpose.msra.mxu0 0.0
    %498 = vmatprep.subr.mxu0 0.0
    %499 = vmatpush1.xpose.msra.mxu0 0.0
    %500 = vmatprep.subr.mxu0 0.0
    %501 = vmatpush1.xpose.msra.mxu0 0.0
    %502 = vmatprep.subr.mxu0 0.0
    %503 = vmatpush1.xpose.msra.mxu0 0.0
    %504 = vmatprep.subr.mxu0 0.0
    %505 = vmatpush1.xpose.msra.mxu0 0.0
    %506 = vmatprep.subr.mxu0 0.0
    %507 = vmatpush1.xpose.msra.mxu0 0.0
    %508 = vmatprep.subr.mxu0 0.0
    %509 = vmatpush1.xpose.msra.mxu0 0.0
    %510 = vmatprep.subr.mxu0 0.0
    %511 = vmatpush1.xpose.msra.mxu0 0.0
    %512 = vmatprep.subr.mxu0 0.0
    %513 = vmatpush1.xpose.msra.mxu0 0.0
    %514 = vmatprep.subr.mxu0 0.0
    %515 = vmatpush1.xpose.msra.mxu0 0.0
    %516 = vmatprep.subr.mxu0 0.0
    %517 = vmatpush1.xpose.msra.mxu0 0.0
    %518 = vmatprep.subr.mxu0 0.0
    %519 = vmatpush1.xpose.msra.mxu0 0.0
    %520 = vmatprep.subr.mxu0 0.0
    %521 = vmatpush1.xpose.msra.mxu0 0.0
    %522 = vmatprep.subr.mxu0 0.0
    %523 = vmatpush1.xpose.msra.mxu0 0.0
    %524 = vmatprep.subr.mxu0 0.0
    %525 = vmatpush1.xpose.msra.mxu0 0.0
    %526 = vmatprep.subr.mxu0 0.0
    %527 = vmatpush1.xpose.msra.mxu0 0.0
    %528 = vmatprep.subr.mxu0 0.0
    %529 = vmatpush1.xpose.msra.mxu0 0.0
    %530 = vmatprep.subr.mxu0 0.0
    %531 = vmatpush1.xpose.msra.mxu0 0.0
    %532 = vmatprep.mubr.f32.mxu0 0.0
    %533 = vmatmul.mubr.f32.gmra.mrb[0].mxu0 %v464
    %v534 = vpop.f32.mrb[0].mxu0
    %v535 = vadd.f32 0.0, %v534
    %v536 = vpop.f32.mrb[0].mxu0
    %537 = vdwg.mxu0
    %v538 = vsel %vm463, %v417, 0
    %v540 = vsel %vm463, %v431, 0
    %542 = vmatprep.subr.mxu0 0.0
    %543 = vmatpush1.xpose.msra.mxu0 %v540
    %544 = vmatprep.subr.mxu0 0.0
    %545 = vmatpush1.xpose.msra.mxu0 0.0
    %546 = vmatprep.subr.mxu0 0.0
    %547 = vmatpush1.xpose.msra.mxu0 0.0
    %548 = vmatprep.subr.mxu0 0.0
    %549 = vmatpush1.xpose.msra.mxu0 0.0
    %550 = vmatprep.subr.mxu0 0.0
    %551 = vmatpush1.xpose.msra.mxu0 0.0
    %552 = vmatprep.subr.mxu0 0.0
    %553 = vmatpush1.xpose.msra.mxu0 0.0
    %554 = vmatprep.subr.mxu0 0.0
    %555 = vmatpush1.xpose.msra.mxu0 0.0
    %556 = vmatprep.subr.mxu0 0.0
    %557 = vmatpush1.xpose.msra.mxu0 0.0
    %558 = vmatprep.subr.mxu0 0.0
    %559 = vmatpush1.xpose.msra.mxu0 0.0
    %560 = vmatprep.subr.mxu0 0.0
    %561 = vmatpush1.xpose.msra.mxu0 0.0
    %562 = vmatprep.subr.mxu0 0.0
    %563 = vmatpush1.xpose.msra.mxu0 0.0
    %564 = vmatprep.subr.mxu0 0.0
    %565 = vmatpush1.xpose.msra.mxu0 0.0
    %566 = vmatprep.subr.mxu0 0.0
    %567 = vmatpush1.xpose.msra.mxu0 0.0
    %568 = vmatprep.subr.mxu0 0.0
    %569 = vmatpush1.xpose.msra.mxu0 0.0
    %570 = vmatprep.subr.mxu0 0.0
    %571 = vmatpush1.xpose.msra.mxu0 0.0
    %572 = vmatprep.subr.mxu0 0.0
    %573 = vmatpush1.xpose.msra.mxu0 0.0
    %574 = vmatprep.subr.mxu0 0.0
    %575 = vmatpush1.xpose.msra.mxu0 0.0
    %576 = vmatprep.subr.mxu0 0.0
    %577 = vmatpush1.xpose.msra.mxu0 0.0
    %578 = vmatprep.subr.mxu0 0.0
    %579 = vmatpush1.xpose.msra.mxu0 0.0
    %580 = vmatprep.subr.mxu0 0.0
    %581 = vmatpush1.xpose.msra.mxu0 0.0
    %582 = vmatprep.subr.mxu0 0.0
    %583 = vmatpush1.xpose.msra.mxu0 0.0
    %584 = vmatprep.subr.mxu0 0.0
    %585 = vmatpush1.xpose.msra.mxu0 0.0
    %586 = vmatprep.subr.mxu0 0.0
    %587 = vmatpush1.xpose.msra.mxu0 0.0
    %588 = vmatprep.subr.mxu0 0.0
    %589 = vmatpush1.xpose.msra.mxu0 0.0
    %590 = vmatprep.subr.mxu0 0.0
    %591 = vmatpush1.xpose.msra.mxu0 0.0
    %592 = vmatprep.subr.mxu0 0.0
    %593 = vmatpush1.xpose.msra.mxu0 0.0
    %594 = vmatprep.subr.mxu0 0.0
    %595 = vmatpush1.xpose.msra.mxu0 0.0
    %596 = vmatprep.subr.mxu0 0.0
    %597 = vmatpush1.xpose.msra.mxu0 0.0
    %598 = vmatprep.subr.mxu0 0.0
    %599 = vmatpush1.xpose.msra.mxu0 0.0
    %600 = vmatprep.subr.mxu0 0.0
    %601 = vmatpush1.xpose.msra.mxu0 0.0
    %602 = vmatprep.subr.mxu0 0.0
    %603 = vmatpush1.xpose.msra.mxu0 0.0
    %604 = vmatprep.subr.mxu0 0.0
    %605 = vmatpush1.xpose.msra.mxu0 0.0
    %606 = vmatprep.mubr.f32.mxu0 0.0
    %607 = vmatmul.mubr.f32.gmra.mrb[0].mxu0 %v538
    %v608 = vpop.f32.mrb[0].mxu0
    %v609 = vadd.f32 0.0, %v608
    %v610 = vpop.f32.mrb[0].mxu0
    %611 = vdwg.mxu0
    %v612 = vsel %vm463, %v419, 0
    %v614 = vsel %vm463, %v433, 0
    %616 = vmatprep.subr.mxu0 0.0
    %617 = vmatpush1.xpose.msra.mxu0 %v614
    %618 = vmatprep.subr.mxu0 0.0
    %619 = vmatpush1.xpose.msra.mxu0 0.0
    %620 = vmatprep.subr.mxu0 0.0
    %621 = vmatpush1.xpose.msra.mxu0 0.0
    %622 = vmatprep.subr.mxu0 0.0
    %623 = vmatpush1.xpose.msra.mxu0 0.0
    %624 = vmatprep.subr.mxu0 0.0
    %625 = vmatpush1.xpose.msra.mxu0 0.0
    %626 = vmatprep.subr.mxu0 0.0
    %627 = vmatpush1.xpose.msra.mxu0 0.0
    %628 = vmatprep.subr.mxu0 0.0
    %629 = vmatpush1.xpose.msra.mxu0 0.0
    %630 = vmatprep.subr.mxu0 0.0
    %631 = vmatpush1.xpose.msra.mxu0 0.0
    %632 = vmatprep.subr.mxu0 0.0
    %633 = vmatpush1.xpose.msra.mxu0 0.0
    %634 = vmatprep.subr.mxu0 0.0
    %635 = vmatpush1.xpose.msra.mxu0 0.0
    %636 = vmatprep.subr.mxu0 0.0
    %637 = vmatpush1.xpose.msra.mxu0 0.0
    %638 = vmatprep.subr.mxu0 0.0
    %639 = vmatpush1.xpose.msra.mxu0 0.0
    %640 = vmatprep.subr.mxu0 0.0
    %641 = vmatpush1.xpose.msra.mxu0 0.0
    %642 = vmatprep.subr.mxu0 0.0
    %643 = vmatpush1.xpose.msra.mxu0 0.0
    %644 = vmatprep.subr.mxu0 0.0
    %645 = vmatpush1.xpose.msra.mxu0 0.0
    %646 = vmatprep.subr.mxu0 0.0
    %647 = vmatpush1.xpose.msra.mxu0 0.0
    %648 = vmatprep.subr.mxu0 0.0
    %649 = vmatpush1.xpose.msra.mxu0 0.0
    %650 = vmatprep.subr.mxu0 0.0
    %651 = vmatpush1.xpose.msra.mxu0 0.0
    %652 = vmatprep.subr.mxu0 0.0
    %653 = vmatpush1.xpose.msra.mxu0 0.0
    %654 = vmatprep.subr.mxu0 0.0
    %655 = vmatpush1.xpose.msra.mxu0 0.0
    %656 = vmatprep.subr.mxu0 0.0
    %657 = vmatpush1.xpose.msra.mxu0 0.0
    %658 = vmatprep.subr.mxu0 0.0
    %659 = vmatpush1.xpose.msra.mxu0 0.0
    %660 = vmatprep.subr.mxu0 0.0
    %661 = vmatpush1.xpose.msra.mxu0 0.0
    %662 = vmatprep.subr.mxu0 0.0
    %663 = vmatpush1.xpose.msra.mxu0 0.0
    %664 = vmatprep.subr.mxu0 0.0
    %665 = vmatpush1.xpose.msra.mxu0 0.0
    %666 = vmatprep.subr.mxu0 0.0
    %667 = vmatpush1.xpose.msra.mxu0 0.0
    %668 = vmatprep.subr.mxu0 0.0
    %669 = vmatpush1.xpose.msra.mxu0 0.0
    %670 = vmatprep.subr.mxu0 0.0
    %671 = vmatpush1.xpose.msra.mxu0 0.0
    %672 = vmatprep.subr.mxu0 0.0
    %673 = vmatpush1.xpose.msra.mxu0 0.0
    %674 = vmatprep.subr.mxu0 0.0
    %675 = vmatpush1.xpose.msra.mxu0 0.0
    %676 = vmatprep.subr.mxu0 0.0
    %677 = vmatpush1.xpose.msra.mxu0 0.0
    %678 = vmatprep.subr.mxu0 0.0
    %679 = vmatpush1.xpose.msra.mxu0 0.0
    %680 = vmatprep.mubr.f32.mxu0 0.0
    %681 = vmatmul.mubr.f32.gmra.mrb[0].mxu0 %v612
    %v682 = vpop.f32.mrb[0].mxu0
    %v683 = vadd.f32 0.0, %v682
    %v684 = vpop.f32.mrb[0].mxu0
    %685 = vdwg.mxu0
    %v686 = vsel %vm463, %v421, 0
    %v688 = vsel %vm463, %v435, 0
    %690 = vmatprep.subr.mxu0 0.0
    %691 = vmatpush1.xpose.msra.mxu0 %v688
    %692 = vmatprep.subr.mxu0 0.0
    %693 = vmatpush1.xpose.msra.mxu0 0.0
    %694 = vmatprep.subr.mxu0 0.0
    %695 = vmatpush1.xpose.msra.mxu0 0.0
    %696 = vmatprep.subr.mxu0 0.0
    %697 = vmatpush1.xpose.msra.mxu0 0.0
    %698 = vmatprep.subr.mxu0 0.0
    %699 = vmatpush1.xpose.msra.mxu0 0.0
    %700 = vmatprep.subr.mxu0 0.0
    %701 = vmatpush1.xpose.msra.mxu0 0.0
    %702 = vmatprep.subr.mxu0 0.0
    %703 = vmatpush1.xpose.msra.mxu0 0.0
    %704 = vmatprep.subr.mxu0 0.0
    %705 = vmatpush1.xpose.msra.mxu0 0.0
    %706 = vmatprep.subr.mxu0 0.0
    %707 = vmatpush1.xpose.msra.mxu0 0.0
    %708 = vmatprep.subr.mxu0 0.0
    %709 = vmatpush1.xpose.msra.mxu0 0.0
    %710 = vmatprep.subr.mxu0 0.0
    %711 = vmatpush1.xpose.msra.mxu0 0.0
    %712 = vmatprep.subr.mxu0 0.0
    %713 = vmatpush1.xpose.msra.mxu0 0.0
    %714 = vmatprep.subr.mxu0 0.0
    %715 = vmatpush1.xpose.msra.mxu0 0.0
    %716 = vmatprep.subr.mxu0 0.0
    %717 = vmatpush1.xpose.msra.mxu0 0.0
    %718 = vmatprep.subr.mxu0 0.0
    %719 = vmatpush1.xpose.msra.mxu0 0.0
    %720 = vmatprep.subr.mxu0 0.0
    %721 = vmatpush1.xpose.msra.mxu0 0.0
    %722 = vmatprep.subr.mxu0 0.0
    %723 = vmatpush1.xpose.msra.mxu0 0.0
    %724 = vmatprep.subr.mxu0 0.0
    %725 = vmatpush1.xpose.msra.mxu0 0.0
    %726 = vmatprep.subr.mxu0 0.0
    %727 = vmatpush1.xpose.msra.mxu0 0.0
    %728 = vmatprep.subr.mxu0 0.0
    %729 = vmatpush1.xpose.msra.mxu0 0.0
    %730 = vmatprep.subr.mxu0 0.0
    %731 = vmatpush1.xpose.msra.mxu0 0.0
    %732 = vmatprep.subr.mxu0 0.0
    %733 = vmatpush1.xpose.msra.mxu0 0.0
    %734 = vmatprep.subr.mxu0 0.0
    %735 = vmatpush1.xpose.msra.mxu0 0.0
    %736 = vmatprep.subr.mxu0 0.0
    %737 = vmatpush1.xpose.msra.mxu0 0.0
    %738 = vmatprep.subr.mxu0 0.0
    %739 = vmatpush1.xpose.msra.mxu0 0.0
    %740 = vmatprep.subr.mxu0 0.0
    %741 = vmatpush1.xpose.msra.mxu0 0.0
    %742 = vmatprep.subr.mxu0 0.0
    %743 = vmatpush1.xpose.msra.mxu0 0.0
    %744 = vmatprep.subr.mxu0 0.0
    %745 = vmatpush1.xpose.msra.mxu0 0.0
    %746 = vmatprep.subr.mxu0 0.0
    %747 = vmatpush1.xpose.msra.mxu0 0.0
    %748 = vmatprep.subr.mxu0 0.0
    %749 = vmatpush1.xpose.msra.mxu0 0.0
    %750 = vmatprep.subr.mxu0 0.0
    %751 = vmatpush1.xpose.msra.mxu0 0.0
    %752 = vmatprep.subr.mxu0 0.0
    %753 = vmatpush1.xpose.msra.mxu0 0.0
    %754 = vmatprep.mubr.f32.mxu0 0.0
    %755 = vmatmul.mubr.f32.gmra.mrb[0].mxu0 %v686
    %v756 = vpop.f32.mrb[0].mxu0
    %v757 = vadd.f32 0.0, %v756
    %v758 = vpop.f32.mrb[0].mxu0
    %759 = vdwg.mxu0
    %v760 = vsel %vm463, %v228, 0
    %v762 = vsel %vm463, %v320, 0
    %764 = vmatprep.subr.mxu0 0.0
    %765 = vmatpush1.xpose.msra.mxu0 %v762
    %766 = vmatprep.subr.mxu0 0.0
    %767 = vmatpush1.xpose.msra.mxu0 0.0
    %768 = vmatprep.subr.mxu0 0.0
    %769 = vmatpush1.xpose.msra.mxu0 0.0
    %770 = vmatprep.subr.mxu0 0.0
    %771 = vmatpush1.xpose.msra.mxu0 0.0
    %772 = vmatprep.subr.mxu0 0.0
    %773 = vmatpush1.xpose.msra.mxu0 0.0
    %774 = vmatprep.subr.mxu0 0.0
    %775 = vmatpush1.xpose.msra.mxu0 0.0
    %776 = vmatprep.subr.mxu0 0.0
    %777 = vmatpush1.xpose.msra.mxu0 0.0
    %778 = vmatprep.subr.mxu0 0.0
    %779 = vmatpush1.xpose.msra.mxu0 0.0
    %780 = vmatprep.subr.mxu0 0.0
    %781 = vmatpush1.xpose.msra.mxu0 0.0
    %782 = vmatprep.subr.mxu0 0.0
    %783 = vmatpush1.xpose.msra.mxu0 0.0
    %784 = vmatprep.subr.mxu0 0.0
    %785 = vmatpush1.xpose.msra.mxu0 0.0
    %786 = vmatprep.subr.mxu0 0.0
    %787 = vmatpush1.xpose.msra.mxu0 0.0
    %788 = vmatprep.subr.mxu0 0.0
    %789 = vmatpush1.xpose.msra.mxu0 0.0
    %790 = vmatprep.subr.mxu0 0.0
    %791 = vmatpush1.xpose.msra.mxu0 0.0
    %792 = vmatprep.subr.mxu0 0.0
    %793 = vmatpush1.xpose.msra.mxu0 0.0
    %794 = vmatprep.subr.mxu0 0.0
    %795 = vmatpush1.xpose.msra.mxu0 0.0
    %796 = vmatprep.subr.mxu0 0.0
    %797 = vmatpush1.xpose.msra.mxu0 0.0
    %798 = vmatprep.subr.mxu0 0.0
    %799 = vmatpush1.xpose.msra.mxu0 0.0
    %800 = vmatprep.subr.mxu0 0.0
    %801 = vmatpush1.xpose.msra.mxu0 0.0
    %802 = vmatprep.subr.mxu0 0.0
    %803 = vmatpush1.xpose.msra.mxu0 0.0
    %804 = vmatprep.subr.mxu0 0.0
    %805 = vmatpush1.xpose.msra.mxu0 0.0
    %806 = vmatprep.subr.mxu0 0.0
    %807 = vmatpush1.xpose.msra.mxu0 0.0
    %808 = vmatprep.subr.mxu0 0.0
    %809 = vmatpush1.xpose.msra.mxu0 0.0
    %810 = vmatprep.subr.mxu0 0.0
    %811 = vmatpush1.xpose.msra.mxu0 0.0
    %812 = vmatprep.subr.mxu0 0.0
    %813 = vmatpush1.xpose.msra.mxu0 0.0
    %814 = vmatprep.subr.mxu0 0.0
    %815 = vmatpush1.xpose.msra.mxu0 0.0
    %816 = vmatprep.subr.mxu0 0.0
    %817 = vmatpush1.xpose.msra.mxu0 0.0
    %818 = vmatprep.subr.mxu0 0.0
    %819 = vmatpush1.xpose.msra.mxu0 0.0
    %820 = vmatprep.subr.mxu0 0.0
    %821 = vmatpush1.xpose.msra.mxu0 0.0
    %822 = vmatprep.subr.mxu0 0.0
    %823 = vmatpush1.xpose.msra.mxu0 0.0
    %824 = vmatprep.subr.mxu0 0.0
    %825 = vmatpush1.xpose.msra.mxu0 0.0
    %826 = vmatprep.subr.mxu0 0.0
    %827 = vmatpush1.xpose.msra.mxu0 0.0
    %828 = vmatprep.mubr.f32.mxu0 0.0
    %829 = vmatmul.mubr.f32.gmra.mrb[0].mxu0 %v760
    %v830 = vpop.f32.mrb[0].mxu0
    %v831 = vadd.f32 0.0, %v830
    %v832 = vpop.f32.mrb[0].mxu0
    %833 = vdwg.mxu0
    %v834 = vsel %vm463, %v424, 0
    %v836 = vsel %vm463, %v438, 0
    %838 = vmatprep.subr.mxu0 0.0
    %839 = vmatpush1.xpose.msra.mxu0 %v836
    %840 = vmatprep.subr.mxu0 0.0
    %841 = vmatpush1.xpose.msra.mxu0 0.0
    %842 = vmatprep.subr.mxu0 0.0
    %843 = vmatpush1.xpose.msra.mxu0 0.0
    %844 = vmatprep.subr.mxu0 0.0
    %845 = vmatpush1.xpose.msra.mxu0 0.0
    %846 = vmatprep.subr.mxu0 0.0
    %847 = vmatpush1.xpose.msra.mxu0 0.0
    %848 = vmatprep.subr.mxu0 0.0
    %849 = vmatpush1.xpose.msra.mxu0 0.0
    %850 = vmatprep.subr.mxu0 0.0
    %851 = vmatpush1.xpose.msra.mxu0 0.0
    %852 = vmatprep.subr.mxu0 0.0
    %853 = vmatpush1.xpose.msra.mxu0 0.0
    %854 = vmatprep.subr.mxu0 0.0
    %855 = vmatpush1.xpose.msra.mxu0 0.0
    %856 = vmatprep.subr.mxu0 0.0
    %857 = vmatpush1.xpose.msra.mxu0 0.0
    %858 = vmatprep.subr.mxu0 0.0
    %859 = vmatpush1.xpose.msra.mxu0 0.0
    %860 = vmatprep.subr.mxu0 0.0
    %861 = vmatpush1.xpose.msra.mxu0 0.0
    %862 = vmatprep.subr.mxu0 0.0
    %863 = vmatpush1.xpose.msra.mxu0 0.0
    %864 = vmatprep.subr.mxu0 0.0
    %865 = vmatpush1.xpose.msra.mxu0 0.0
    %866 = vmatprep.subr.mxu0 0.0
    %867 = vmatpush1.xpose.msra.mxu0 0.0
    %868 = vmatprep.subr.mxu0 0.0
    %869 = vmatpush1.xpose.msra.mxu0 0.0
    %870 = vmatprep.subr.mxu0 0.0
    %871 = vmatpush1.xpose.msra.mxu0 0.0
    %872 = vmatprep.subr.mxu0 0.0
    %873 = vmatpush1.xpose.msra.mxu0 0.0
    %874 = vmatprep.subr.mxu0 0.0
    %875 = vmatpush1.xpose.msra.mxu0 0.0
    %876 = vmatprep.subr.mxu0 0.0
    %877 = vmatpush1.xpose.msra.mxu0 0.0
    %878 = vmatprep.subr.mxu0 0.0
    %879 = vmatpush1.xpose.msra.mxu0 0.0
    %880 = vmatprep.subr.mxu0 0.0
    %881 = vmatpush1.xpose.msra.mxu0 0.0
    %882 = vmatprep.subr.mxu0 0.0
    %883 = vmatpush1.xpose.msra.mxu0 0.0
    %884 = vmatprep.subr.mxu0 0.0
    %885 = vmatpush1.xpose.msra.mxu0 0.0
    %886 = vmatprep.subr.mxu0 0.0
    %887 = vmatpush1.xpose.msra.mxu0 0.0
    %888 = vmatprep.subr.mxu0 0.0
    %889 = vmatpush1.xpose.msra.mxu0 0.0
    %890 = vmatprep.subr.mxu0 0.0
    %891 = vmatpush1.xpose.msra.mxu0 0.0
    %892 = vmatprep.subr.mxu0 0.0
    %893 = vmatpush1.xpose.msra.mxu0 0.0
    %894 = vmatprep.subr.mxu0 0.0
    %895 = vmatpush1.xpose.msra.mxu0 0.0
    %896 = vmatprep.subr.mxu0 0.0
    %897 = vmatpush1.xpose.msra.mxu0 0.0
    %898 = vmatprep.subr.mxu0 0.0
    %899 = vmatpush1.xpose.msra.mxu0 0.0
    %900 = vmatprep.subr.mxu0 0.0
    %901 = vmatpush1.xpose.msra.mxu0 0.0
    %902 = vmatprep.mubr.f32.mxu0 0.0
    %903 = vmatmul.mubr.f32.gmra.mrb[0].mxu0 %v834
    %v904 = vpop.f32.mrb[0].mxu0
    %v905 = vadd.f32 0.0, %v904
    %v906 = vpop.f32.mrb[0].mxu0
    %907 = vdwg.mxu0
    %v908 = vsel %vm463, %v426, 0
    %v910 = vsel %vm463, %v440, 0
    %912 = vmatprep.subr.mxu0 0.0
    %913 = vmatpush1.xpose.msra.mxu0 %v910
    %914 = vmatprep.subr.mxu0 0.0
    %915 = vmatpush1.xpose.msra.mxu0 0.0
    %916 = vmatprep.subr.mxu0 0.0
    %917 = vmatpush1.xpose.msra.mxu0 0.0
    %918 = vmatprep.subr.mxu0 0.0
    %919 = vmatpush1.xpose.msra.mxu0 0.0
    %920 = vmatprep.subr.mxu0 0.0
    %921 = vmatpush1.xpose.msra.mxu0 0.0
    %922 = vmatprep.subr.mxu0 0.0
    %923 = vmatpush1.xpose.msra.mxu0 0.0
    %924 = vmatprep.subr.mxu0 0.0
    %925 = vmatpush1.xpose.msra.mxu0 0.0
    %926 = vmatprep.subr.mxu0 0.0
    %927 = vmatpush1.xpose.msra.mxu0 0.0
    %928 = vmatprep.subr.mxu0 0.0
    %929 = vmatpush1.xpose.msra.mxu0 0.0
    %930 = vmatprep.subr.mxu0 0.0
    %931 = vmatpush1.xpose.msra.mxu0 0.0
    %932 = vmatprep.subr.mxu0 0.0
    %933 = vmatpush1.xpose.msra.mxu0 0.0
    %934 = vmatprep.subr.mxu0 0.0
    %935 = vmatpush1.xpose.msra.mxu0 0.0
    %936 = vmatprep.subr.mxu0 0.0
    %937 = vmatpush1.xpose.msra.mxu0 0.0
    %938 = vmatprep.subr.mxu0 0.0
    %939 = vmatpush1.xpose.msra.mxu0 0.0
    %940 = vmatprep.subr.mxu0 0.0
    %941 = vmatpush1.xpose.msra.mxu0 0.0
    %942 = vmatprep.subr.mxu0 0.0
    %943 = vmatpush1.xpose.msra.mxu0 0.0
    %944 = vmatprep.subr.mxu0 0.0
    %945 = vmatpush1.xpose.msra.mxu0 0.0
    %946 = vmatprep.subr.mxu0 0.0
    %947 = vmatpush1.xpose.msra.mxu0 0.0
    %948 = vmatprep.subr.mxu0 0.0
    %949 = vmatpush1.xpose.msra.mxu0 0.0
    %950 = vmatprep.subr.mxu0 0.0
    %951 = vmatpush1.xpose.msra.mxu0 0.0
    %952 = vmatprep.subr.mxu0 0.0
    %953 = vmatpush1.xpose.msra.mxu0 0.0
    %954 = vmatprep.subr.mxu0 0.0
    %955 = vmatpush1.xpose.msra.mxu0 0.0
    %956 = vmatprep.subr.mxu0 0.0
    %957 = vmatpush1.xpose.msra.mxu0 0.0
    %958 = vmatprep.subr.mxu0 0.0
    %959 = vmatpush1.xpose.msra.mxu0 0.0
    %960 = vmatprep.subr.mxu0 0.0
    %961 = vmatpush1.xpose.msra.mxu0 0.0
    %962 = vmatprep.subr.mxu0 0.0
    %963 = vmatpush1.xpose.msra.mxu0 0.0
    %964 = vmatprep.subr.mxu0 0.0
    %965 = vmatpush1.xpose.msra.mxu0 0.0
    %966 = vmatprep.subr.mxu0 0.0
    %967 = vmatpush1.xpose.msra.mxu0 0.0
    %968 = vmatprep.subr.mxu0 0.0
    %969 = vmatpush1.xpose.msra.mxu0 0.0
    %970 = vmatprep.subr.mxu0 0.0
    %971 = vmatpush1.xpose.msra.mxu0 0.0
    %972 = vmatprep.subr.mxu0 0.0
    %973 = vmatpush1.xpose.msra.mxu0 0.0
    %974 = vmatprep.subr.mxu0 0.0
    %975 = vmatpush1.xpose.msra.mxu0 0.0
    %976 = vmatprep.mubr.f32.mxu0 0.0
    %977 = vmatmul.mubr.f32.gmra.mrb[0].mxu0 %v908
    %v978 = vpop.f32.mrb[0].mxu0
    %v979 = vadd.f32 0.0, %v978
    %v980 = vpop.f32.mrb[0].mxu0
    %981 = vdwg.mxu0
    %v982 = vsel %vm463, %v428, 0
    %v984 = vsel %vm463, %v442, 0
    %986 = vmatprep.subr.mxu0 0.0
    %987 = vmatpush1.xpose.msra.mxu0 %v984
    %988 = vmatprep.subr.mxu0 0.0
    %989 = vmatpush1.xpose.msra.mxu0 0.0
    %990 = vmatprep.subr.mxu0 0.0
    %991 = vmatpush1.xpose.msra.mxu0 0.0
    %992 = vmatprep.subr.mxu0 0.0
    %993 = vmatpush1.xpose.msra.mxu0 0.0
    %994 = vmatprep.subr.mxu0 0.0
    %995 = vmatpush1.xpose.msra.mxu0 0.0
    %996 = vmatprep.subr.mxu0 0.0
    %997 = vmatpush1.xpose.msra.mxu0 0.0
    %998 = vmatprep.subr.mxu0 0.0
    %999 = vmatpush1.xpose.msra.mxu0 0.0
    %1000 = vmatprep.subr.mxu0 0.0
    %1001 = vmatpush1.xpose.msra.mxu0 0.0
    %1002 = vmatprep.subr.mxu0 0.0
    %1003 = vmatpush1.xpose.msra.mxu0 0.0
    %1004 = vmatprep.subr.mxu0 0.0
    %1005 = vmatpush1.xpose.msra.mxu0 0.0
    %1006 = vmatprep.subr.mxu0 0.0
    %1007 = vmatpush1.xpose.msra.mxu0 0.0
    %1008 = vmatprep.subr.mxu0 0.0
    %1009 = vmatpush1.xpose.msra.mxu0 0.0
    %1010 = vmatprep.subr.mxu0 0.0
    %1011 = vmatpush1.xpose.msra.mxu0 0.0
    %1012 = vmatprep.subr.mxu0 0.0
    %1013 = vmatpush1.xpose.msra.mxu0 0.0
    %1014 = vmatprep.subr.mxu0 0.0
    %1015 = vmatpush1.xpose.msra.mxu0 0.0
    %1016 = vmatprep.subr.mxu0 0.0
    %1017 = vmatpush1.xpose.msra.mxu0 0.0
    %1018 = vmatprep.subr.mxu0 0.0
    %1019 = vmatpush1.xpose.msra.mxu0 0.0
    %1020 = vmatprep.subr.mxu0 0.0
    %1021 = vmatpush1.xpose.msra.mxu0 0.0
    %1022 = vmatprep.subr.mxu0 0.0
    %1023 = vmatpush1.xpose.msra.mxu0 0.0
    %1024 = vmatprep.subr.mxu0 0.0
    %1025 = vmatpush1.xpose.msra.mxu0 0.0
    %1026 = vmatprep.subr.mxu0 0.0
    %1027 = vmatpush1.xpose.msra.mxu0 0.0
    %1028 = vmatprep.subr.mxu0 0.0
    %1029 = vmatpush1.xpose.msra.mxu0 0.0
    %1030 = vmatprep.subr.mxu0 0.0
    %1031 = vmatpush1.xpose.msra.mxu0 0.0
    %1032 = vmatprep.subr.mxu0 0.0
    %1033 = vmatpush1.xpose.msra.mxu0 0.0
    %1034 = vmatprep.subr.mxu0 0.0
    %1035 = vmatpush1.xpose.msra.mxu0 0.0
    %1036 = vmatprep.subr.mxu0 0.0
    %1037 = vmatpush1.xpose.msra.mxu0 0.0
    %1038 = vmatprep.subr.mxu0 0.0
    %1039 = vmatpush1.xpose.msra.mxu0 0.0
    %1040 = vmatprep.subr.mxu0 0.0
    %1041 = vmatpush1.xpose.msra.mxu0 0.0
    %1042 = vmatprep.subr.mxu0 0.0
    %1043 = vmatpush1.xpose.msra.mxu0 0.0
    %1044 = vmatprep.subr.mxu0 0.0
    %1045 = vmatpush1.xpose.msra.mxu0 0.0
    %1046 = vmatprep.subr.mxu0 0.0
    %1047 = vmatpush1.xpose.msra.mxu0 0.0
    %1048 = vmatprep.subr.mxu0 0.0
    %1049 = vmatpush1.xpose.msra.mxu0 0.0
    %1050 = vmatprep.mubr.f32.mxu0 0.0
    %1051 = vmatmul.mubr.f32.gmra.mrb[0].mxu0 %v982
    %v1052 = vpop.f32.mrb[0].mxu0
    %v1053 = vadd.f32 0.0, %v1052
    %v1054 = vpop.f32.mrb[0].mxu0
    %1055 = vdwg.mxu0
    %v1056 = vsel %vm463, %v535, -inf
    %1057 = vmax.xlane.f32.xlu0 %v1056
    %v1058 = vpop.xlane.xlu0 %1057
    %v1059 = vsel %vm463, %v609, -inf
    %1060 = vmax.xlane.f32.xlu0 %v1059
    %v1061 = vpop.xlane.xlu0 %1060
    %v1062 = vsel %vm463, %v683, -inf
    %1063 = vmax.xlane.f32.xlu0 %v1062
    %v1064 = vpop.xlane.xlu0 %1063
    %v1065 = vsel %vm463, %v757, -inf
    %1066 = vmax.xlane.f32.xlu0 %v1065
    %v1067 = vpop.xlane.xlu0 %1066
    %v1068 = vsel %vm463, %v831, -inf
    %1069 = vmax.xlane.f32.xlu0 %v1068
    %v1070 = vpop.xlane.xlu0 %1069
    %v1071 = vsel %vm463, %v905, -inf
    %1072 = vmax.xlane.f32.xlu0 %v1071
    %v1073 = vpop.xlane.xlu0 %1072
    %v1074 = vsel %vm463, %v979, -inf
    %1075 = vmax.xlane.f32.xlu0 %v1074
    %v1076 = vpop.xlane.xlu0 %1075
    %v1077 = vsel %vm463, %v1053, -inf
    %1078 = vmax.xlane.f32.xlu0 %v1077
    %v1079 = vpop.xlane.xlu0 %1078
    %v1080 = vsub.f32 %v535, %v1058
    %v1081 = vsub.f32 %v609, %v1061
    %v1082 = vsub.f32 %v683, %v1064
    %v1083 = vsub.f32 %v757, %v1067
    %v1084 = vsub.f32 %v831, %v1070
    %v1085 = vsub.f32 %v905, %v1073
    %v1086 = vsub.f32 %v979, %v1076
    %v1087 = vsub.f32 %v1053, %v1079
    %v1088 = vmul.f32 %v1080, 1.442695
    %v1089 = vpow.pop %v1088
    %v1090 = vmul.f32 %v1081, 1.442695
    %v1091 = vpow.pop %v1090
    %v1092 = vmul.f32 %v1082, 1.442695
    %v1093 = vpow.pop %v1092
    %v1094 = vmul.f32 %v1083, 1.442695
    %v1095 = vpow.pop %v1094
    %v1096 = vmul.f32 %v1084, 1.442695
    %v1097 = vpow.pop %v1096
    %v1098 = vmul.f32 %v1085, 1.442695
    %v1099 = vpow.pop %v1098
    %v1100 = vmul.f32 %v1086, 1.442695
    %v1101 = vpow.pop %v1100
    %v1102 = vmul.f32 %v1087, 1.442695
    %v1103 = vpow.pop %v1102
    %v1104 = vsel %vm463, %v1089, 0.0
    %1105 = vadd.xlane.f32.xlu0 %v1104
    %v1106 = vpop.xlane.xlu0 %1105
    %v1107 = vsel %vm463, %v1091, 0.0
    %1108 = vadd.xlane.f32.xlu0 %v1107
    %v1109 = vpop.xlane.xlu0 %1108
    %v1110 = vsel %vm463, %v1093, 0.0
    %1111 = vadd.xlane.f32.xlu0 %v1110
    %v1112 = vpop.xlane.xlu0 %1111
    %v1113 = vsel %vm463, %v1095, 0.0
    %1114 = vadd.xlane.f32.xlu0 %v1113
    %v1115 = vpop.xlane.xlu0 %1114
    %v1116 = vsel %vm463, %v1097, 0.0
    %1117 = vadd.xlane.f32.xlu0 %v1116
    %v1118 = vpop.xlane.xlu0 %1117
    %v1119 = vsel %vm463, %v1099, 0.0
    %1120 = vadd.xlane.f32.xlu0 %v1119
    %v1121 = vpop.xlane.xlu0 %1120
    %v1122 = vsel %vm463, %v1101, 0.0
    %1123 = vadd.xlane.f32.xlu0 %v1122
    %v1124 = vpop.xlane.xlu0 %1123
    %v1125 = vsel %vm463, %v1103, 0.0
    %1126 = vadd.xlane.f32.xlu0 %v1125
    %v1127 = vpop.xlane.xlu0 %1126
    %v1128 = vrcp.pop %v1106
    %v1129 = vrcp.pop %v1109
    %v1130 = vrcp.pop %v1112
    %v1131 = vrcp.pop %v1115
    %v1132 = vrcp.pop %v1118
    %v1133 = vrcp.pop %v1121
    %v1134 = vrcp.pop %v1124
    %v1135 = vrcp.pop %v1127
    %v1136 = vmul.f32 %v1106, %v1128
    %v1137 = vmul.f32 %v1109, %v1129
    %v1138 = vmul.f32 %v1112, %v1130
    %v1139 = vmul.f32 %v1115, %v1131
    %v1140 = vmul.f32 %v1118, %v1132
    %v1141 = vmul.f32 %v1121, %v1133
    %v1142 = vmul.f32 %v1124, %v1134
    %v1143 = vmul.f32 %v1127, %v1135
    %v1144 = vsub.f32 2.0, %v1136
    %v1145 = vsub.f32 2.0, %v1137
    %v1146 = vsub.f32 2.0, %v1138
    %v1147 = vsub.f32 2.0, %v1139
    %v1148 = vsub.f32 2.0, %v1140
    %v1149 = vsub.f32 2.0, %v1141
    %v1150 = vsub.f32 2.0, %v1142
    %v1151 = vsub.f32 2.0, %v1143
    %v1152 = vmul.f32 %v1128, %v1144
    %v1153 = vmul.f32 %v1129, %v1145
    %v1154 = vmul.f32 %v1130, %v1146
    %v1155 = vmul.f32 %v1131, %v1147
    %v1156 = vmul.f32 %v1132, %v1148
    %v1157 = vmul.f32 %v1133, %v1149
    %v1158 = vmul.f32 %v1134, %v1150
    %v1159 = vmul.f32 %v1135, %v1151
    %v1160 = vmul.f32 %v1089, %v1152
    %v1161 = vmul.f32 %v1091, %v1153
    %v1162 = vmul.f32 %v1093, %v1154
    %v1163 = vmul.f32 %v1095, %v1155
    %v1164 = vmul.f32 %v1097, %v1156
    %v1165 = vmul.f32 %v1099, %v1157
    %v1166 = vmul.f32 %v1101, %v1158
    %v1167 = vmul.f32 %v1103, %v1159
    %v1169 = vsel %vm463, %v1160, 0
    %1171 = vmatprep.subr.mxu0 0.0
    %1172 = vmatpush1.msra.mxu0 %v407
    %1173 = vmatprep.subr.mxu0 0.0
    %1174 = vmatpush1.msra.mxu0 0.0
    %1175 = vmatprep.subr.mxu0 0.0
    %1176 = vmatpush1.msra.mxu0 0.0
    %1177 = vmatprep.subr.mxu0 0.0
    %1178 = vmatpush1.msra.mxu0 0.0
    %1179 = vmatprep.subr.mxu0 0.0
    %1180 = vmatpush1.msra.mxu0 0.0
    %1181 = vmatprep.subr.mxu0 0.0
    %1182 = vmatpush1.msra.mxu0 0.0
    %1183 = vmatprep.subr.mxu0 0.0
    %1184 = vmatpush1.msra.mxu0 0.0
    %1185 = vmatprep.subr.mxu0 0.0
    %1186 = vmatpush1.msra.mxu0 0.0
    %1187 = vmatprep.subr.mxu0 0.0
    %1188 = vmatpush1.msra.mxu0 0.0
    %1189 = vmatprep.subr.mxu0 0.0
    %1190 = vmatpush1.msra.mxu0 0.0
    %1191 = vmatprep.subr.mxu0 0.0
    %1192 = vmatpush1.msra.mxu0 0.0
    %1193 = vmatprep.subr.mxu0 0.0
    %1194 = vmatpush1.msra.mxu0 0.0
    %1195 = vmatprep.subr.mxu0 0.0
    %1196 = vmatpush1.msra.mxu0 0.0
    %1197 = vmatprep.subr.mxu0 0.0
    %1198 = vmatpush1.msra.mxu0 0.0
    %1199 = vmatprep.subr.mxu0 0.0
    %1200 = vmatpush1.msra.mxu0 0.0
    %1201 = vmatprep.subr.mxu0 0.0
    %1202 = vmatpush1.msra.mxu0 0.0
    %1203 = vmatprep.subr.mxu0 0.0
    %1204 = vmatpush1.msra.mxu0 0.0
    %1205 = vmatprep.subr.mxu0 0.0
    %1206 = vmatpush1.msra.mxu0 0.0
    %1207 = vmatprep.subr.mxu0 0.0
    %1208 = vmatpush1.msra.mxu0 0.0
    %1209 = vmatprep.subr.mxu0 0.0
    %1210 = vmatpush1.msra.mxu0 0.0
    %1211 = vmatprep.subr.mxu0 0.0
    %1212 = vmatpush1.msra.mxu0 0.0
    %1213 = vmatprep.subr.mxu0 0.0
    %1214 = vmatpush1.msra.mxu0 0.0
    %1215 = vmatprep.subr.mxu0 0.0
    %1216 = vmatpush1.msra.mxu0 0.0
    %1217 = vmatprep.subr.mxu0 0.0
    %1218 = vmatpush1.msra.mxu0 0.0
    %1219 = vmatprep.subr.mxu0 0.0
    %1220 = vmatpush1.msra.mxu0 0.0
    %1221 = vmatprep.subr.mxu0 0.0
    %1222 = vmatpush1.msra.mxu0 0.0
    %1223 = vmatprep.subr.mxu0 0.0
    %1224 = vmatpush1.msra.mxu0 0.0
    %1225 = vmatprep.subr.mxu0 0.0
    %1226 = vmatpush1.msra.mxu0 0.0
    %1227 = vmatprep.subr.mxu0 0.0
    %1228 = vmatpush1.msra.mxu0 0.0
    %1229 = vmatprep.subr.mxu0 0.0
    %1230 = vmatpush1.msra.mxu0 0.0
    %1231 = vmatprep.subr.mxu0 0.0
    %1232 = vmatpush1.msra.mxu0 0.0
    %1233 = vmatprep.subr.mxu0 0.0
    %1234 = vmatpush1.msra.mxu0 0.0
    %1235 = vmatprep.mubr.f32.mxu0 0.0
    %1236 = vmatmul.mubr.f32.gmra.mrb[0].mxu0 %v1169
    %v1237 = vpop.f32.mrb[0].mxu0
    %v1238 = vadd.f32 0.0, %v1237
    %v1239 = vpop.f32.mrb[0].mxu0
    %1240 = vdwg.mxu0
    %v1242 = vsel %vm463, %v1161, 0
    %1244 = vmatprep.subr.mxu0 0.0
    %1245 = vmatpush1.msra.mxu0 %v445
    %1246 = vmatprep.subr.mxu0 0.0
    %1247 = vmatpush1.msra.mxu0 0.0
    %1248 = vmatprep.subr.mxu0 0.0
    %1249 = vmatpush1.msra.mxu0 0.0
    %1250 = vmatprep.subr.mxu0 0.0
    %1251 = vmatpush1.msra.mxu0 0.0
    %1252 = vmatprep.subr.mxu0 0.0
    %1253 = vmatpush1.msra.mxu0 0.0
    %1254 = vmatprep.subr.mxu0 0.0
    %1255 = vmatpush1.msra.mxu0 0.0
    %1256 = vmatprep.subr.mxu0 0.0
    %1257 = vmatpush1.msra.mxu0 0.0
    %1258 = vmatprep.subr.mxu0 0.0
    %1259 = vmatpush1.msra.mxu0 0.0
    %1260 = vmatprep.subr.mxu0 0.0
    %1261 = vmatpush1.msra.mxu0 0.0
    %1262 = vmatprep.subr.mxu0 0.0
    %1263 = vmatpush1.msra.mxu0 0.0
    %1264 = vmatprep.subr.mxu0 0.0
    %1265 = vmatpush1.msra.mxu0 0.0
    %1266 = vmatprep.subr.mxu0 0.0
    %1267 = vmatpush1.msra.mxu0 0.0
    %1268 = vmatprep.subr.mxu0 0.0
    %1269 = vmatpush1.msra.mxu0 0.0
    %1270 = vmatprep.subr.mxu0 0.0
    %1271 = vmatpush1.msra.mxu0 0.0
    %1272 = vmatprep.subr.mxu0 0.0
    %1273 = vmatpush1.msra.mxu0 0.0
    %1274 = vmatprep.subr.mxu0 0.0
    %1275 = vmatpush1.msra.mxu0 0.0
    %1276 = vmatprep.subr.mxu0 0.0
    %1277 = vmatpush1.msra.mxu0 0.0
    %1278 = vmatprep.subr.mxu0 0.0
    %1279 = vmatpush1.msra.mxu0 0.0
    %1280 = vmatprep.subr.mxu0 0.0
    %1281 = vmatpush1.msra.mxu0 0.0
    %1282 = vmatprep.subr.mxu0 0.0
    %1283 = vmatpush1.msra.mxu0 0.0
    %1284 = vmatprep.subr.mxu0 0.0
    %1285 = vmatpush1.msra.mxu0 0.0
    %1286 = vmatprep.subr.mxu0 0.0
    %1287 = vmatpush1.msra.mxu0 0.0
    %1288 = vmatprep.subr.mxu0 0.0
    %1289 = vmatpush1.msra.mxu0 0.0
    %1290 = vmatprep.subr.mxu0 0.0
    %1291 = vmatpush1.msra.mxu0 0.0
    %1292 = vmatprep.subr.mxu0 0.0
    %1293 = vmatpush1.msra.mxu0 0.0
    %1294 = vmatprep.subr.mxu0 0.0
    %1295 = vmatpush1.msra.mxu0 0.0
    %1296 = vmatprep.subr.mxu0 0.0
    %1297 = vmatpush1.msra.mxu0 0.0
    %1298 = vmatprep.subr.mxu0 0.0
    %1299 = vmatpush1.msra.mxu0 0.0
    %1300 = vmatprep.subr.mxu0 0.0
    %1301 = vmatpush1.msra.mxu0 0.0
    %1302 = vmatprep.subr.mxu0 0.0
    %1303 = vmatpush1.msra.mxu0 0.0
    %1304 = vmatprep.subr.mxu0 0.0
    %1305 = vmatpush1.msra.mxu0 0.0
    %1306 = vmatprep.subr.mxu0 0.0
    %1307 = vmatpush1.msra.mxu0 0.0
    %1308 = vmatprep.mubr.f32.mxu0 0.0
    %1309 = vmatmul.mubr.f32.gmra.mrb[0].mxu0 %v1242
    %v1310 = vpop.f32.mrb[0].mxu0
    %v1311 = vadd.f32 0.0, %v1310
    %v1312 = vpop.f32.mrb[0].mxu0
    %1313 = vdwg.mxu0
    %v1315 = vsel %vm463, %v1162, 0
    %1317 = vmatprep.subr.mxu0 0.0
    %1318 = vmatpush1.msra.mxu0 %v448
    %1319 = vmatprep.subr.mxu0 0.0
    %1320 = vmatpush1.msra.mxu0 0.0
    %1321 = vmatprep.subr.mxu0 0.0
    %1322 = vmatpush1.msra.mxu0 0.0
    %1323 = vmatprep.subr.mxu0 0.0
    %1324 = vmatpush1.msra.mxu0 0.0
    %1325 = vmatprep.subr.mxu0 0.0
    %1326 = vmatpush1.msra.mxu0 0.0
    %1327 = vmatprep.subr.mxu0 0.0
    %1328 = vmatpush1.msra.mxu0 0.0
    %1329 = vmatprep.subr.mxu0 0.0
    %1330 = vmatpush1.msra.mxu0 0.0
    %1331 = vmatprep.subr.mxu0 0.0
    %1332 = vmatpush1.msra.mxu0 0.0
    %1333 = vmatprep.subr.mxu0 0.0
    %1334 = vmatpush1.msra.mxu0 0.0
    %1335 = vmatprep.subr.mxu0 0.0
    %1336 = vmatpush1.msra.mxu0 0.0
    %1337 = vmatprep.subr.mxu0 0.0
    %1338 = vmatpush1.msra.mxu0 0.0
    %1339 = vmatprep.subr.mxu0 0.0
    %1340 = vmatpush1.msra.mxu0 0.0
    %1341 = vmatprep.subr.mxu0 0.0
    %1342 = vmatpush1.msra.mxu0 0.0
    %1343 = vmatprep.subr.mxu0 0.0
    %1344 = vmatpush1.msra.mxu0 0.0
    %1345 = vmatprep.subr.mxu0 0.0
    %1346 = vmatpush1.msra.mxu0 0.0
    %1347 = vmatprep.subr.mxu0 0.0
    %1348 = vmatpush1.msra.mxu0 0.0
    %1349 = vmatprep.subr.mxu0 0.0
    %1350 = vmatpush1.msra.mxu0 0.0
    %1351 = vmatprep.subr.mxu0 0.0
    %1352 = vmatpush1.msra.mxu0 0.0
    %1353 = vmatprep.subr.mxu0 0.0
    %1354 = vmatpush1.msra.mxu0 0.0
    %1355 = vmatprep.subr.mxu0 0.0
    %1356 = vmatpush1.msra.mxu0 0.0
    %1357 = vmatprep.subr.mxu0 0.0
    %1358 = vmatpush1.msra.mxu0 0.0
    %1359 = vmatprep.subr.mxu0 0.0
    %1360 = vmatpush1.msra.mxu0 0.0
    %1361 = vmatprep.subr.mxu0 0.0
    %1362 = vmatpush1.msra.mxu0 0.0
    %1363 = vmatprep.subr.mxu0 0.0
    %1364 = vmatpush1.msra.mxu0 0.0
    %1365 = vmatprep.subr.mxu0 0.0
    %1366 = vmatpush1.msra.mxu0 0.0
    %1367 = vmatprep.subr.mxu0 0.0
    %1368 = vmatpush1.msra.mxu0 0.0
    %1369 = vmatprep.subr.mxu0 0.0
    %1370 = vmatpush1.msra.mxu0 0.0
    %1371 = vmatprep.subr.mxu0 0.0
    %1372 = vmatpush1.msra.mxu0 0.0
    %1373 = vmatprep.subr.mxu0 0.0
    %1374 = vmatpush1.msra.mxu0 0.0
    %1375 = vmatprep.subr.mxu0 0.0
    %1376 = vmatpush1.msra.mxu0 0.0
    %1377 = vmatprep.subr.mxu0 0.0
    %1378 = vmatpush1.msra.mxu0 0.0
    %1379 = vmatprep.subr.mxu0 0.0
    %1380 = vmatpush1.msra.mxu0 0.0
    %1381 = vmatprep.mubr.f32.mxu0 0.0
    %1382 = vmatmul.mubr.f32.gmra.mrb[0].mxu0 %v1315
    %v1383 = vpop.f32.mrb[0].mxu0
    %v1384 = vadd.f32 0.0, %v1383
    %v1385 = vpop.f32.mrb[0].mxu0
    %1386 = vdwg.mxu0
    %v1388 = vsel %vm463, %v1163, 0
    %1390 = vmatprep.subr.mxu0 0.0
    %1391 = vmatpush1.msra.mxu0 %v451
    %1392 = vmatprep.subr.mxu0 0.0
    %1393 = vmatpush1.msra.mxu0 0.0
    %1394 = vmatprep.subr.mxu0 0.0
    %1395 = vmatpush1.msra.mxu0 0.0
    %1396 = vmatprep.subr.mxu0 0.0
    %1397 = vmatpush1.msra.mxu0 0.0
    %1398 = vmatprep.subr.mxu0 0.0
    %1399 = vmatpush1.msra.mxu0 0.0
    %1400 = vmatprep.subr.mxu0 0.0
    %1401 = vmatpush1.msra.mxu0 0.0
    %1402 = vmatprep.subr.mxu0 0.0
    %1403 = vmatpush1.msra.mxu0 0.0
    %1404 = vmatprep.subr.mxu0 0.0
    %1405 = vmatpush1.msra.mxu0 0.0
    %1406 = vmatprep.subr.mxu0 0.0
    %1407 = vmatpush1.msra.mxu0 0.0
    %1408 = vmatprep.subr.mxu0 0.0
    %1409 = vmatpush1.msra.mxu0 0.0
    %1410 = vmatprep.subr.mxu0 0.0
    %1411 = vmatpush1.msra.mxu0 0.0
    %1412 = vmatprep.subr.mxu0 0.0
    %1413 = vmatpush1.msra.mxu0 0.0
    %1414 = vmatprep.subr.mxu0 0.0
    %1415 = vmatpush1.msra.mxu0 0.0
    %1416 = vmatprep.subr.mxu0 0.0
    %1417 = vmatpush1.msra.mxu0 0.0
    %1418 = vmatprep.subr.mxu0 0.0
    %1419 = vmatpush1.msra.mxu0 0.0
    %1420 = vmatprep.subr.mxu0 0.0
    %1421 = vmatpush1.msra.mxu0 0.0
    %1422 = vmatprep.subr.mxu0 0.0
    %1423 = vmatpush1.msra.mxu0 0.0
    %1424 = vmatprep.subr.mxu0 0.0
    %1425 = vmatpush1.msra.mxu0 0.0
    %1426 = vmatprep.subr.mxu0 0.0
    %1427 = vmatpush1.msra.mxu0 0.0
    %1428 = vmatprep.subr.mxu0 0.0
    %1429 = vmatpush1.msra.mxu0 0.0
    %1430 = vmatprep.subr.mxu0 0.0
    %1431 = vmatpush1.msra.mxu0 0.0
    %1432 = vmatprep.subr.mxu0 0.0
    %1433 = vmatpush1.msra.mxu0 0.0
    %1434 = vmatprep.subr.mxu0 0.0
    %1435 = vmatpush1.msra.mxu0 0.0
    %1436 = vmatprep.subr.mxu0 0.0
    %1437 = vmatpush1.msra.mxu0 0.0
    %1438 = vmatprep.subr.mxu0 0.0
    %1439 = vmatpush1.msra.mxu0 0.0
    %1440 = vmatprep.subr.mxu0 0.0
    %1441 = vmatpush1.msra.mxu0 0.0
    %1442 = vmatprep.subr.mxu0 0.0
    %1443 = vmatpush1.msra.mxu0 0.0
    %1444 = vmatprep.subr.mxu0 0.0
    %1445 = vmatpush1.msra.mxu0 0.0
    %1446 = vmatprep.subr.mxu0 0.0
    %1447 = vmatpush1.msra.mxu0 0.0
    %1448 = vmatprep.subr.mxu0 0.0
    %1449 = vmatpush1.msra.mxu0 0.0
    %1450 = vmatprep.subr.mxu0 0.0
    %1451 = vmatpush1.msra.mxu0 0.0
    %1452 = vmatprep.subr.mxu0 0.0
    %1453 = vmatpush1.msra.mxu0 0.0
    %1454 = vmatprep.mubr.f32.mxu0 0.0
    %1455 = vmatmul.mubr.f32.gmra.mrb[0].mxu0 %v1388
    %v1456 = vpop.f32.mrb[0].mxu0
    %v1457 = vadd.f32 0.0, %v1456
    %v1458 = vpop.f32.mrb[0].mxu0
    %1459 = vdwg.mxu0
    %v1461 = vsel %vm463, %v1164, 0
    %1463 = vmatprep.subr.mxu0 0.0
    %1464 = vmatpush1.msra.mxu0 %v412
    %1465 = vmatprep.subr.mxu0 0.0
    %1466 = vmatpush1.msra.mxu0 0.0
    %1467 = vmatprep.subr.mxu0 0.0
    %1468 = vmatpush1.msra.mxu0 0.0
    %1469 = vmatprep.subr.mxu0 0.0
    %1470 = vmatpush1.msra.mxu0 0.0
    %1471 = vmatprep.subr.mxu0 0.0
    %1472 = vmatpush1.msra.mxu0 0.0
    %1473 = vmatprep.subr.mxu0 0.0
    %1474 = vmatpush1.msra.mxu0 0.0
    %1475 = vmatprep.subr.mxu0 0.0
    %1476 = vmatpush1.msra.mxu0 0.0
    %1477 = vmatprep.subr.mxu0 0.0
    %1478 = vmatpush1.msra.mxu0 0.0
    %1479 = vmatprep.subr.mxu0 0.0
    %1480 = vmatpush1.msra.mxu0 0.0
    %1481 = vmatprep.subr.mxu0 0.0
    %1482 = vmatpush1.msra.mxu0 0.0
    %1483 = vmatprep.subr.mxu0 0.0
    %1484 = vmatpush1.msra.mxu0 0.0
    %1485 = vmatprep.subr.mxu0 0.0
    %1486 = vmatpush1.msra.mxu0 0.0
    %1487 = vmatprep.subr.mxu0 0.0
    %1488 = vmatpush1.msra.mxu0 0.0
    %1489 = vmatprep.subr.mxu0 0.0
    %1490 = vmatpush1.msra.mxu0 0.0
    %1491 = vmatprep.subr.mxu0 0.0
    %1492 = vmatpush1.msra.mxu0 0.0
    %1493 = vmatprep.subr.mxu0 0.0
    %1494 = vmatpush1.msra.mxu0 0.0
    %1495 = vmatprep.subr.mxu0 0.0
    %1496 = vmatpush1.msra.mxu0 0.0
    %1497 = vmatprep.subr.mxu0 0.0
    %1498 = vmatpush1.msra.mxu0 0.0
    %1499 = vmatprep.subr.mxu0 0.0
    %1500 = vmatpush1.msra.mxu0 0.0
    %1501 = vmatprep.subr.mxu0 0.0
    %1502 = vmatpush1.msra.mxu0 0.0
    %1503 = vmatprep.subr.mxu0 0.0
    %1504 = vmatpush1.msra.mxu0 0.0
    %1505 = vmatprep.subr.mxu0 0.0
    %1506 = vmatpush1.msra.mxu0 0.0
    %1507 = vmatprep.subr.mxu0 0.0
    %1508 = vmatpush1.msra.mxu0 0.0
    %1509 = vmatprep.subr.mxu0 0.0
    %1510 = vmatpush1.msra.mxu0 0.0
    %1511 = vmatprep.subr.mxu0 0.0
    %1512 = vmatpush1.msra.mxu0 0.0
    %1513 = vmatprep.subr.mxu0 0.0
    %1514 = vmatpush1.msra.mxu0 0.0
    %1515 = vmatprep.subr.mxu0 0.0
    %1516 = vmatpush1.msra.mxu0 0.0
    %1517 = vmatprep.subr.mxu0 0.0
    %1518 = vmatpush1.msra.mxu0 0.0
    %1519 = vmatprep.subr.mxu0 0.0
    %1520 = vmatpush1.msra.mxu0 0.0
    %1521 = vmatprep.subr.mxu0 0.0
    %1522 = vmatpush1.msra.mxu0 0.0
    %1523 = vmatprep.subr.mxu0 0.0
    %1524 = vmatpush1.msra.mxu0 0.0
    %1525 = vmatprep.subr.mxu0 0.0
    %1526 = vmatpush1.msra.mxu0 0.0
    %1527 = vmatprep.mubr.f32.mxu0 0.0
    %1528 = vmatmul.mubr.f32.gmra.mrb[0].mxu0 %v1461
    %v1529 = vpop.f32.mrb[0].mxu0
    %v1530 = vadd.f32 0.0, %v1529
    %v1531 = vpop.f32.mrb[0].mxu0
    %1532 = vdwg.mxu0
    %v1534 = vsel %vm463, %v1165, 0
    %1536 = vmatprep.subr.mxu0 0.0
    %1537 = vmatpush1.msra.mxu0 %v455
    %1538 = vmatprep.subr.mxu0 0.0
    %1539 = vmatpush1.msra.mxu0 0.0
    %1540 = vmatprep.subr.mxu0 0.0
    %1541 = vmatpush1.msra.mxu0 0.0
    %1542 = vmatprep.subr.mxu0 0.0
    %1543 = vmatpush1.msra.mxu0 0.0
    %1544 = vmatprep.subr.mxu0 0.0
    %1545 = vmatpush1.msra.mxu0 0.0
    %1546 = vmatprep.subr.mxu0 0.0
    %1547 = vmatpush1.msra.mxu0 0.0
    %1548 = vmatprep.subr.mxu0 0.0
    %1549 = vmatpush1.msra.mxu0 0.0
    %1550 = vmatprep.subr.mxu0 0.0
    %1551 = vmatpush1.msra.mxu0 0.0
    %1552 = vmatprep.subr.mxu0 0.0
    %1553 = vmatpush1.msra.mxu0 0.0
    %1554 = vmatprep.subr.mxu0 0.0
    %1555 = vmatpush1.msra.mxu0 0.0
    %1556 = vmatprep.subr.mxu0 0.0
    %1557 = vmatpush1.msra.mxu0 0.0
    %1558 = vmatprep.subr.mxu0 0.0
    %1559 = vmatpush1.msra.mxu0 0.0
    %1560 = vmatprep.subr.mxu0 0.0
    %1561 = vmatpush1.msra.mxu0 0.0
    %1562 = vmatprep.subr.mxu0 0.0
    %1563 = vmatpush1.msra.mxu0 0.0
    %1564 = vmatprep.subr.mxu0 0.0
    %1565 = vmatpush1.msra.mxu0 0.0
    %1566 = vmatprep.subr.mxu0 0.0
    %1567 = vmatpush1.msra.mxu0 0.0
    %1568 = vmatprep.subr.mxu0 0.0
    %1569 = vmatpush1.msra.mxu0 0.0
    %1570 = vmatprep.subr.mxu0 0.0
    %1571 = vmatpush1.msra.mxu0 0.0
    %1572 = vmatprep.subr.mxu0 0.0
    %1573 = vmatpush1.msra.mxu0 0.0
    %1574 = vmatprep.subr.mxu0 0.0
    %1575 = vmatpush1.msra.mxu0 0.0
    %1576 = vmatprep.subr.mxu0 0.0
    %1577 = vmatpush1.msra.mxu0 0.0
    %1578 = vmatprep.subr.mxu0 0.0
    %1579 = vmatpush1.msra.mxu0 0.0
    %1580 = vmatprep.subr.mxu0 0.0
    %1581 = vmatpush1.msra.mxu0 0.0
    %1582 = vmatprep.subr.mxu0 0.0
    %1583 = vmatpush1.msra.mxu0 0.0
    %1584 = vmatprep.subr.mxu0 0.0
    %1585 = vmatpush1.msra.mxu0 0.0
    %1586 = vmatprep.subr.mxu0 0.0
    %1587 = vmatpush1.msra.mxu0 0.0
    %1588 = vmatprep.subr.mxu0 0.0
    %1589 = vmatpush1.msra.mxu0 0.0
    %1590 = vmatprep.subr.mxu0 0.0
    %1591 = vmatpush1.msra.mxu0 0.0
    %1592 = vmatprep.subr.mxu0 0.0
    %1593 = vmatpush1.msra.mxu0 0.0
    %1594 = vmatprep.subr.mxu0 0.0
    %1595 = vmatpush1.msra.mxu0 0.0
    %1596 = vmatprep.subr.mxu0 0.0
    %1597 = vmatpush1.msra.mxu0 0.0
    %1598 = vmatprep.subr.mxu0 0.0
    %1599 = vmatpush1.msra.mxu0 0.0
    %1600 = vmatprep.mubr.f32.mxu0 0.0
    %1601 = vmatmul.mubr.f32.gmra.mrb[0].mxu0 %v1534
    %v1602 = vpop.f32.mrb[0].mxu0
    %v1603 = vadd.f32 0.0, %v1602
    %v1604 = vpop.f32.mrb[0].mxu0
    %1605 = vdwg.mxu0
    %v1607 = vsel %vm463, %v1166, 0
    %1609 = vmatprep.subr.mxu0 0.0
    %1610 = vmatpush1.msra.mxu0 %v458
    %1611 = vmatprep.subr.mxu0 0.0
    %1612 = vmatpush1.msra.mxu0 0.0
    %1613 = vmatprep.subr.mxu0 0.0
    %1614 = vmatpush1.msra.mxu0 0.0
    %1615 = vmatprep.subr.mxu0 0.0
    %1616 = vmatpush1.msra.mxu0 0.0
    %1617 = vmatprep.subr.mxu0 0.0
    %1618 = vmatpush1.msra.mxu0 0.0
    %1619 = vmatprep.subr.mxu0 0.0
    %1620 = vmatpush1.msra.mxu0 0.0
    %1621 = vmatprep.subr.mxu0 0.0
    %1622 = vmatpush1.msra.mxu0 0.0
    %1623 = vmatprep.subr.mxu0 0.0
    %1624 = vmatpush1.msra.mxu0 0.0
    %1625 = vmatprep.subr.mxu0 0.0
    %1626 = vmatpush1.msra.mxu0 0.0
    %1627 = vmatprep.subr.mxu0 0.0
    %1628 = vmatpush1.msra.mxu0 0.0
    %1629 = vmatprep.subr.mxu0 0.0
    %1630 = vmatpush1.msra.mxu0 0.0
    %1631 = vmatprep.subr.mxu0 0.0
    %1632 = vmatpush1.msra.mxu0 0.0
    %1633 = vmatprep.subr.mxu0 0.0
    %1634 = vmatpush1.msra.mxu0 0.0
    %1635 = vmatprep.subr.mxu0 0.0
    %1636 = vmatpush1.msra.mxu0 0.0
    %1637 = vmatprep.subr.mxu0 0.0
    %1638 = vmatpush1.msra.mxu0 0.0
    %1639 = vmatprep.subr.mxu0 0.0
    %1640 = vmatpush1.msra.mxu0 0.0
    %1641 = vmatprep.subr.mxu0 0.0
    %1642 = vmatpush1.msra.mxu0 0.0
    %1643 = vmatprep.subr.mxu0 0.0
    %1644 = vmatpush1.msra.mxu0 0.0
    %1645 = vmatprep.subr.mxu0 0.0
    %1646 = vmatpush1.msra.mxu0 0.0
    %1647 = vmatprep.subr.mxu0 0.0
    %1648 = vmatpush1.msra.mxu0 0.0
    %1649 = vmatprep.subr.mxu0 0.0
    %1650 = vmatpush1.msra.mxu0 0.0
    %1651 = vmatprep.subr.mxu0 0.0
    %1652 = vmatpush1.msra.mxu0 0.0
    %1653 = vmatprep.subr.mxu0 0.0
    %1654 = vmatpush1.msra.mxu0 0.0
    %1655 = vmatprep.subr.mxu0 0.0
    %1656 = vmatpush1.msra.mxu0 0.0
    %1657 = vmatprep.subr.mxu0 0.0
    %1658 = vmatpush1.msra.mxu0 0.0
    %1659 = vmatprep.subr.mxu0 0.0
    %1660 = vmatpush1.msra.mxu0 0.0
    %1661 = vmatprep.subr.mxu0 0.0
    %1662 = vmatpush1.msra.mxu0 0.0
    %1663 = vmatprep.subr.mxu0 0.0
    %1664 = vmatpush1.msra.mxu0 0.0
    %1665 = vmatprep.subr.mxu0 0.0
    %1666 = vmatpush1.msra.mxu0 0.0
    %1667 = vmatprep.subr.mxu0 0.0
    %1668 = vmatpush1.msra.mxu0 0.0
    %1669 = vmatprep.subr.mxu0 0.0
    %1670 = vmatpush1.msra.mxu0 0.0
    %1671 = vmatprep.subr.mxu0 0.0
    %1672 = vmatpush1.msra.mxu0 0.0
    %1673 = vmatprep.mubr.f32.mxu0 0.0
    %1674 = vmatmul.mubr.f32.gmra.mrb[0].mxu0 %v1607
    %v1675 = vpop.f32.mrb[0].mxu0
    %v1676 = vadd.f32 0.0, %v1675
    %v1677 = vpop.f32.mrb[0].mxu0
    %1678 = vdwg.mxu0
    %v1680 = vsel %vm463, %v1167, 0
    %1682 = vmatprep.subr.mxu0 0.0
    %1683 = vmatpush1.msra.mxu0 %v461
    %1684 = vmatprep.subr.mxu0 0.0
    %1685 = vmatpush1.msra.mxu0 0.0
    %1686 = vmatprep.subr.mxu0 0.0
    %1687 = vmatpush1.msra.mxu0 0.0
    %1688 = vmatprep.subr.mxu0 0.0
    %1689 = vmatpush1.msra.mxu0 0.0
    %1690 = vmatprep.subr.mxu0 0.0
    %1691 = vmatpush1.msra.mxu0 0.0
    %1692 = vmatprep.subr.mxu0 0.0
    %1693 = vmatpush1.msra.mxu0 0.0
    %1694 = vmatprep.subr.mxu0 0.0
    %1695 = vmatpush1.msra.mxu0 0.0
    %1696 = vmatprep.subr.mxu0 0.0
    %1697 = vmatpush1.msra.mxu0 0.0
    %1698 = vmatprep.subr.mxu0 0.0
    %1699 = vmatpush1.msra.mxu0 0.0
    %1700 = vmatprep.subr.mxu0 0.0
    %1701 = vmatpush1.msra.mxu0 0.0
    %1702 = vmatprep.subr.mxu0 0.0
    %1703 = vmatpush1.msra.mxu0 0.0
    %1704 = vmatprep.subr.mxu0 0.0
    %1705 = vmatpush1.msra.mxu0 0.0
    %1706 = vmatprep.subr.mxu0 0.0
    %1707 = vmatpush1.msra.mxu0 0.0
    %1708 = vmatprep.subr.mxu0 0.0
    %1709 = vmatpush1.msra.mxu0 0.0
    %1710 = vmatprep.subr.mxu0 0.0
    %1711 = vmatpush1.msra.mxu0 0.0
    %1712 = vmatprep.subr.mxu0 0.0
    %1713 = vmatpush1.msra.mxu0 0.0
    %1714 = vmatprep.subr.mxu0 0.0
    %1715 = vmatpush1.msra.mxu0 0.0
    %1716 = vmatprep.subr.mxu0 0.0
    %1717 = vmatpush1.msra.mxu0 0.0
    %1718 = vmatprep.subr.mxu0 0.0
    %1719 = vmatpush1.msra.mxu0 0.0
    %1720 = vmatprep.subr.mxu0 0.0
    %1721 = vmatpush1.msra.mxu0 0.0
    %1722 = vmatprep.subr.mxu0 0.0
    %1723 = vmatpush1.msra.mxu0 0.0
    %1724 = vmatprep.subr.mxu0 0.0
    %1725 = vmatpush1.msra.mxu0 0.0
    %1726 = vmatprep.subr.mxu0 0.0
    %1727 = vmatpush1.msra.mxu0 0.0
    %1728 = vmatprep.subr.mxu0 0.0
    %1729 = vmatpush1.msra.mxu0 0.0
    %1730 = vmatprep.subr.mxu0 0.0
    %1731 = vmatpush1.msra.mxu0 0.0
    %1732 = vmatprep.subr.mxu0 0.0
    %1733 = vmatpush1.msra.mxu0 0.0
    %1734 = vmatprep.subr.mxu0 0.0
    %1735 = vmatpush1.msra.mxu0 0.0
    %1736 = vmatprep.subr.mxu0 0.0
    %1737 = vmatpush1.msra.mxu0 0.0
    %1738 = vmatprep.subr.mxu0 0.0
    %1739 = vmatpush1.msra.mxu0 0.0
    %1740 = vmatprep.subr.mxu0 0.0
    %1741 = vmatpush1.msra.mxu0 0.0
    %1742 = vmatprep.subr.mxu0 0.0
    %1743 = vmatpush1.msra.mxu0 0.0
    %1744 = vmatprep.subr.mxu0 0.0
    %1745 = vmatpush1.msra.mxu0 0.0
    %1746 = vmatprep.mubr.f32.mxu0 0.0
    %1747 = vmatmul.mubr.f32.gmra.mrb[0].mxu0 %v1680
    %v1748 = vpop.f32.mrb[0].mxu0
    %v1749 = vadd.f32 0.0, %v1748
    %v1750 = vpop.f32.mrb[0].mxu0
    %1751 = vdwg.mxu0
    %1753 = vrot.lane.b32.xlu0 %v1311, 8
    %v1754 = vpop.permute.xlu0 %1753
    %1757 = vrot.lane.b32.xlu0 %v1384, 16
    %v1758 = vpop.permute.xlu0 %1757
    %1761 = vrot.lane.b32.xlu0 %v1457, 24
    %v1762 = vpop.permute.xlu0 %1761
    %v1764 = vsel %vm463, %v1238, %v1754
    %vm1765 = vcmask 130048
    %v1766 = vsel %vm1765, %v1764, %v1758
    %vm1767 = vcmask 195584
    %v1768 = vsel %vm1767, %v1766, %v1762
    %1770 = vrot.lane.b32.xlu0 %v1603, 8
    %v1771 = vpop.permute.xlu0 %1770
    %1774 = vrot.lane.b32.xlu0 %v1676, 16
    %v1775 = vpop.permute.xlu0 %1774
    %1778 = vrot.lane.b32.xlu0 %v1749, 24
    %v1779 = vpop.permute.xlu0 %1778
    %v1781 = vsel %vm463, %v1530, %v1771
    %v1782 = vsel %vm1765, %v1781, %v1775
    %v1783 = vsel %vm1767, %v1782, %v1779
    %v1784 = vld [vmem:[%s9] sm:$0xff]
    %v1785 = vld [vmem:[%s9 + $0x8] sm:$0xff]
    %v1786 = vld [vmem:[%s9 + $0x10] sm:$0xff]
    %v1787 = vld [vmem:[%s9 + $0x18] sm:$0xff]
    %v1788 = vld [vmem:[%s10] sm:$0x1]
    %v1790 = vlaneseq
    %v1791 = vshrl.u32 %v1790, 7
    %v1792 = vsub.s32 0, %v1791
    %v1793 = vrot.slane %v1788, %v1792
    %v1796 = vsel %vm149, %v1768, 0
    %v1799 = vsel %vm149, %v1783, 0
    %1801 = vmatprep.subr.mxu0 0.0
    %1802 = vmatpush1.msra.mxu0 %v1784
    %1803 = vmatprep.subr.mxu0 0.0
    %1804 = vmatpush1.msra.mxu0 %v1785
    %1805 = vmatprep.subr.mxu0 0.0
    %1806 = vmatpush1.msra.mxu0 %v1786
    %1807 = vmatprep.subr.mxu0 0.0
    %1808 = vmatpush1.msra.mxu0 %v1787
    %1809 = vmatprep.subr.mxu0 0.0
    %1810 = vmatpush1.msra.mxu0 0.0
    %1811 = vmatprep.subr.mxu0 0.0
    %1812 = vmatpush1.msra.mxu0 0.0
    %1813 = vmatprep.subr.mxu0 0.0
    %1814 = vmatpush1.msra.mxu0 0.0
    %1815 = vmatprep.subr.mxu0 0.0
    %1816 = vmatpush1.msra.mxu0 0.0
    %1817 = vmatprep.subr.mxu0 0.0
    %1818 = vmatpush1.msra.mxu0 0.0
    %1819 = vmatprep.subr.mxu0 0.0
    %1820 = vmatpush1.msra.mxu0 0.0
    %1821 = vmatprep.subr.mxu0 0.0
    %1822 = vmatpush1.msra.mxu0 0.0
    %1823 = vmatprep.subr.mxu0 0.0
    %1824 = vmatpush1.msra.mxu0 0.0
    %1825 = vmatprep.subr.mxu0 0.0
    %1826 = vmatpush1.msra.mxu0 0.0
    %1827 = vmatprep.subr.mxu0 0.0
    %1828 = vmatpush1.msra.mxu0 0.0
    %1829 = vmatprep.subr.mxu0 0.0
    %1830 = vmatpush1.msra.mxu0 0.0
    %1831 = vmatprep.subr.mxu0 0.0
    %1832 = vmatpush1.msra.mxu0 0.0
    %1833 = vmatprep.subr.mxu0 0.0
    %1834 = vmatpush1.msra.mxu0 0.0
    %1835 = vmatprep.subr.mxu0 0.0
    %1836 = vmatpush1.msra.mxu0 0.0
    %1837 = vmatprep.subr.mxu0 0.0
    %1838 = vmatpush1.msra.mxu0 0.0
    %1839 = vmatprep.subr.mxu0 0.0
    %1840 = vmatpush1.msra.mxu0 0.0
    %1841 = vmatprep.subr.mxu0 0.0
    %1842 = vmatpush1.msra.mxu0 0.0
    %1843 = vmatprep.subr.mxu0 0.0
    %1844 = vmatpush1.msra.mxu0 0.0
    %1845 = vmatprep.subr.mxu0 0.0
    %1846 = vmatpush1.msra.mxu0 0.0
    %1847 = vmatprep.subr.mxu0 0.0
    %1848 = vmatpush1.msra.mxu0 0.0
    %1849 = vmatprep.subr.mxu0 0.0
    %1850 = vmatpush1.msra.mxu0 0.0
    %1851 = vmatprep.subr.mxu0 0.0
    %1852 = vmatpush1.msra.mxu0 0.0
    %1853 = vmatprep.subr.mxu0 0.0
    %1854 = vmatpush1.msra.mxu0 0.0
    %1855 = vmatprep.subr.mxu0 0.0
    %1856 = vmatpush1.msra.mxu0 0.0
    %1857 = vmatprep.subr.mxu0 0.0
    %1858 = vmatpush1.msra.mxu0 0.0
    %1859 = vmatprep.subr.mxu0 0.0
    %1860 = vmatpush1.msra.mxu0 0.0
    %1861 = vmatprep.subr.mxu0 0.0
    %1862 = vmatpush1.msra.mxu0 0.0
    %1863 = vmatprep.subr.mxu0 0.0
    %1864 = vmatpush1.msra.mxu0 0.0
    %1865 = vmatprep.mubr.f32.mxu0 0.0
    %1866 = vmatmul.mubr.f32.gmra.mrb[0].mxu0 %v1796
    %v1867 = vpop.f32.mrb[0].mxu0
    %v1868 = vadd.f32 %v1793, %v1867
    %v1869 = vpop.f32.mrb[0].mxu0
    %1870 = vmatprep.mubr.f32.mxu0 0.0
    %1871 = vmatmul.mubr.f32.gmra.mrb[0].mxu0 %v1799
    %v1872 = vpop.f32.mrb[0].mxu0
    %v1873 = vadd.f32 %v1793, %v1872
    %v1874 = vpop.f32.mrb[0].mxu0
    %1875 = vdwg.mxu0
    %1876 = vst.msk [vmem:[#allocation14] sm:$0xff] %vm149, %v1868
    %1877 = vst.msk [vmem:[#allocation14 + $0x8] sm:$0xff] %vm149, %v1873
    // Predicated region
    $region74: #{tpu_custom_call.1} parent=1 // pred_check
      _
    $region75: #{tpu_custom_call.1} parent=1 // pred_check_branch
      %1879 = sbr.rel (0) target = $region77
    $region76: #{tpu_custom_call.1} parent=1 // pred_region
      %s1881 = ssub.s32 256, 256
      %1882 = vsyncadd [#allocation4], %s1881
      %s1883 = sshll.u32 [#allocation14], 4
      %s1884 = int_to_ptr.vmem [resolvable:$true] %s1883
      %1889 = dma.vmem_to_hbm [thread:$0]  %s1884, 256, %s11, [#allocation4], 128, 128, 8
    $region77: #{tpu_custom_call.1} parent=1 // pred_fallthru
      _
    // Predicated region
    $region78: #{tpu_custom_call.1} parent=1 // pred_check
      _
    $region79: #{tpu_custom_call.1} parent=1 // pred_check_branch
      %1891 = sbr.rel (0) target = $region81
    $region80: #{tpu_custom_call.1} parent=1 // pred_region
      %1892 = dma.done [#allocation4], 256
    $region81: #{tpu_custom_call.1} parent=1 // pred_fallthru
      _
    %1893 = vsyncpa [#allocation3], 1
    %1894 = vsyncpa [#allocation6], 1
    %1895 = vsyncpa [#allocation9], 1
    %1896 = vsyncpa [#allocation12], 1
    %1897 = vsyncpa [#allocation4], 1

</llo_original>
